<compile_context>
chip_gen: v7x
topology: tpu7x:2x2x1
jax: 0.10.0
libtpu: 0.0.40
codegen_flags: <defaults>
</compile_context>

<pallas_src>
import functools
import math

import jax
import jax.numpy as jnp
from jax.experimental import pallas as pl
from jax.experimental.pallas import tpu as pltpu


_TS_MAX = 1024                      # cap on sequence rows per tile
_VMEM_BUDGET = 16 * 1024 * 1024     # target per-step double-buffered working set


def _round_up(a, b):
    return ((a + b - 1) // b) * b


def _tiling(seq_len, competitors, feat, d_model):
    """Sequence-tile size: multiple of 8 (sublanes) and of U (group aligned)."""
    base = (8 * competitors) // math.gcd(8, competitors)       # lcm(8, U)
    row_bytes = 4 * (feat + 2 * d_model) * 2                   # m + x + out, 2 buffers
    cap = min(_TS_MAX, max(base, _VMEM_BUDGET // row_bytes))
    cap = max(base, (cap // base) * base)
    ts = min(cap, _round_up(seq_len, base))
    return ts, -(-seq_len // ts)                               # (tile_rows, num_tiles)


def _lwta_kernel(m_ref, w_ref, u_ref, x_ref, o_ref, *,
                 inv_temperature, seq_len, tile_rows, competitors):
    # Per-(batch, sequence-tile) block:
    #   m_ref: (TS, F)  mask source rows      (out-of-bounds tail rows = garbage)
    #   w_ref: (F, 1)   Linear(512, 1, bias=False) weight
    #   u_ref: (TS, 1)  uniform(0,1) noise, one per row
    #   x_ref: (TS, D)  `input` rows
    #   o_ref: (TS, D)  output rows           (out-of-bounds tail writes dropped)
    U = competitors
    tile = pl.program_id(1)

    # mask = self.ln(m): bias-free 512 -> 1 matvec on the MXU, f32 accumulate.
    mask2 = jnp.dot(m_ref[...].astype(jnp.float32),
                    w_ref[...].astype(jnp.float32),
                    preferred_element_type=jnp.float32,
                    precision=jax.lax.Precision.HIGHEST)            # (TS, 1)

    # Rows past the real sequence are zero in the torch reference (mask2 is a
    # zero-initialized (B, hidden_dim, 1) buffer); this also kills any garbage
    # from the out-of-bounds tail reads of the last tile.
    row = (jax.lax.broadcasted_iota(jnp.int32, (tile_rows, 1), 0)
           + tile * tile_rows)
    mask2 = jnp.where(row < seq_len, mask2, 0.0)

    # concrete_sample: relaxed categorical over each aligned group of U rows.
    eps = 1e-8
    u = u_ref[...].astype(jnp.float32)
    gumbel = -jnp.log(-jnp.log(u + eps) + eps)
    c = (mask2 + gumbel) * inv_temperature                          # (TS, 1)

    # Per-group (U consecutive, U-aligned rows) max / sum broadcast back to
    # every row, via a recursive-doubling butterfly of sublane rotations.
    # U is a power of two and U | tile_rows, so partners never cross groups.
    def group_allreduce(v, op):
        s = 1
        while s < U:
            up = pltpu.roll(v, tile_rows - s, axis=0)               # v[p + s]
            down = pltpu.roll(v, s, axis=0)                         # v[p - s]
            v = op(v, jnp.where(jnp.bitwise_and(row, s) == 0, up, down))
            s *= 2
        return v

    c = c - group_allreduce(c, jnp.maximum)                         # stable softmax
    e = jnp.exp(c)
    xi = e * pl.reciprocal(group_allreduce(e, jnp.add), approx=True)

    # out = xi * input (xi broadcast across the feature dim).
    # NOTE: stores are lane-dense when D is a multiple of 128.
    o_ref[...] = (xi * x_ref[...].astype(jnp.float32)).astype(o_ref.dtype)


def lwta_mask_forward(x, m, w, key=None, *, u_noise=None,
                      competitors=4, temperature=0.01):
    """Eval-mode LWTAMASK forward.

    x : (B, L, D)  -- `input`
    m : (B, L, F)  -- mask source (F = 512 for the torch module)
    w : (F,)       -- Linear(512, 1, bias=False) weight
    u_noise : optional (B, >= ceil(L/U)*U, 1) uniforms for the concrete sample
    """
    B, L, D = x.shape
    Bm, Lm, F = m.shape
    assert (B, L) == (Bm, Lm) and w.shape == (F,)

    U = competitors if competitors > 1 else 2       # torch fallback for U == 1
    assert U & (U - 1) == 0, "competitors must be a power of two"
    hidden_dim = 4 * (L // U) + 4
    # Parity with the torch module's zero-padded reshape path.
    assert hidden_dim % U == 0 and hidden_dim >= L

    ts, nt = _tiling(L, U, F, D)
    rows = nt * ts                                  # rows covered by the grid

    if u_noise is None:
        u_noise = jax.random.uniform(key, (B, rows, 1), dtype=jnp.float32)
    elif u_noise.shape[1] < rows:                   # tiny array; pad is cheap
        u_noise = jnp.pad(u_noise.astype(jnp.float32),
                          ((0, 0), (0, rows - u_noise.shape[1]), (0, 0)),
                          constant_values=0.5)
    else:
        u_noise = u_noise[:, :rows].astype(jnp.float32)

    kernel = functools.partial(
        _lwta_kernel,
        inv_temperature=float(1.0 / temperature),
        seq_len=L, tile_rows=ts, competitors=U)

    return pl.pallas_call(
        kernel,
        out_shape=jax.ShapeDtypeStruct((B, L, D), x.dtype),
        grid=(B, nt),
        in_specs=[
            pl.BlockSpec((None, ts, F), lambda b, t: (b, t, 0)),   # m tile
            pl.BlockSpec((F, 1), lambda b, t: (0, 0)),             # w (resident)
            pl.BlockSpec((None, ts, 1), lambda b, t: (b, t, 0)),   # noise tile
            pl.BlockSpec((None, ts, D), lambda b, t: (b, t, 0)),   # x tile
        ],
        out_specs=pl.BlockSpec((None, ts, D), lambda b, t: (b, t, 0)),
        compiler_params=pltpu.CompilerParams(
            dimension_semantics=("parallel", "parallel"),
            vmem_limit_bytes=32 * 1024 * 1024),
    )(m, w.reshape(F, 1), u_noise, x)


def lwta_reference(x, m, w, u, competitors=4, temperature=0.01):
    """Pure-JAX reference of the eval-mode torch path (same noise layout)."""
    B, L, D = x.shape
    U = competitors if competitors > 1 else 2
    hidden_dim = 4 * (L // U) + 4
    mask = jnp.einsum("blf,f->bl", m.astype(jnp.float32), w.astype(jnp.float32),
                      precision=jax.lax.Precision.HIGHEST)
    mask2 = jnp.zeros((B, hidden_dim), jnp.float32).at[:, :L].set(mask)
    n = max(hidden_dim, u.shape[1])
    noise = jnp.full((B, n), 0.5, jnp.float32).at[:, :u.shape[1]].set(u[..., 0])
    noise = noise[:, :hidden_dim]
    eps = 1e-8
    g = -jnp.log(-jnp.log(noise + eps) + eps)
    logits = ((mask2 + g) * (1.0 / temperature)).reshape(B, hidden_dim // U, U)
    xi = jax.nn.softmax(logits, axis=-1).reshape(B, hidden_dim)[:, :L]
    return (xi[:, :, None] * x.astype(jnp.float32)).astype(x.dtype)


if __name__ == "__main__":
    key = jax.random.PRNGKey(0)
    k_x, k_m, k_w, k_u = jax.random.split(key, 4)

    B, L, D, F = 2, 10, 32, 512        # Linear in-dim fixed at 512 by the module
    COMPETITORS, TEMP = 4, 0.01

    x = jax.random.normal(k_x, (B, L, D), dtype=jnp.float32)      # `input`
    m = jax.random.normal(k_m, (B, L, F), dtype=jnp.float32)      # `m`
    bound = 1.0 / (F ** 0.5)           # nn.Linear(512, 1, bias=False) init bound
    w = jax.random.uniform(k_w, (F,), minval=-bound, maxval=bound,
                           dtype=jnp.float32)

    # One uniform per (possibly padded) competitor slot; L=10, U=4 exercises
    # the zero-logit padded competitors of the last real group.
    u = jax.random.uniform(k_u, (B, _round_up(L, COMPETITORS), 1),
                           dtype=jnp.float32)

    out = lwta_mask_forward(x, m, w, u_noise=u,
                            competitors=COMPETITORS, temperature=TEMP)
    out = jax.block_until_ready(out)
    assert out.shape == (B, L, D) and out.dtype == jnp.float32
    assert bool(jnp.all(jnp.isfinite(out)))

    ref = lwta_reference(x, m, w, u, competitors=COMPETITORS, temperature=TEMP)
    # Loose tolerance: temperature=0.01 amplifies tiny mask2 rounding into the
    # softmax, and the kernel uses the EUP approximate reciprocal.
    assert bool(jnp.allclose(out, ref, rtol=2e-1, atol=2e-2)), (
        "max abs diff %.3e" % float(jnp.max(jnp.abs(out - ref))))
    print("KERNEL_OK")
</pallas_src>

<mosaic_0001>
module attributes {stable_mosaic.version = 11 : i64} {
  func.func @_lwta_kernel(%arg0: i32, %arg1: i32, %arg2: memref<1x16x512xf32, #tpu.memory_space<vmem>>, %arg3: memref<512x1xf32, #tpu.memory_space<vmem>>, %arg4: memref<1x16x1xf32, #tpu.memory_space<vmem>>, %arg5: memref<1x16x32xf32, #tpu.memory_space<vmem>>, %arg6: memref<1x16x32xf32, #tpu.memory_space<vmem>>) attributes {dimension_semantics = [#tpu.dimension_semantics<parallel>, #tpu.dimension_semantics<parallel>], iteration_bounds = array<i64: 2, 1>, scalar_prefetch = 0 : i64, scratch_operands = 0 : i64, tpu.core_type = #tpu.core_type<tc>, window_params = [{transform_indices = @transform_0, window_bounds = array<i64: 1, 16, 512>}, {pipeline_mode = #tpu.pipeline_mode<synchronous>, transform_indices = @transform_1, window_bounds = array<i64: 512, 1>}, {transform_indices = @transform_2, window_bounds = array<i64: 1, 16, 1>}, {transform_indices = @transform_3, window_bounds = array<i64: 1, 16, 32>}, {transform_indices = @transform_4, window_bounds = array<i64: 1, 16, 32>}]} {
    %c0 = arith.constant 0 : index
    %c0_0 = arith.constant 0 : index
    %c0_1 = arith.constant 0 : index
    %0 = vector.load %arg2[%c0, %c0_0, %c0_1] : memref<1x16x512xf32, #tpu.memory_space<vmem>>, vector<1x16x512xf32>
    %1 = vector.shape_cast %0 : vector<1x16x512xf32> to vector<16x512xf32>
    %c0_2 = arith.constant 0 : index
    %c0_3 = arith.constant 0 : index
    %2 = vector.load %arg3[%c0_2, %c0_3] : memref<512x1xf32, #tpu.memory_space<vmem>>, vector<512x1xf32>
    %cst = arith.constant dense<0.000000e+00> : vector<16x1xf32>
    %3 = tpu.matmul %1, %2, %cst {dimension_numbers = #tpu.dot_dimension_numbers<[1], [0], [0], [1], [0, 0, 1, 1], [], []>, precision = #tpu.contract_precision<fp32>} : vector<16x512xf32>, vector<512x1xf32>, vector<16x1xf32> -> vector<16x1xf32>
    %4 = tpu.iota {dimensions = array<i32: 0>} : vector<16x1xi32>
    %c16_i32 = arith.constant 16 : i32
    %5 = arith.muli %arg1, %c16_i32 : i32
    %6 = vector.broadcast %5 : i32 to vector<16x1xi32>
    %7 = arith.addi %4, %6 : vector<16x1xi32>
    %c10_i32 = arith.constant 10 : i32
    %8 = vector.broadcast %c10_i32 : i32 to vector<16x1xi32>
    %9 = arith.cmpi slt, %7, %8 : vector<16x1xi32>
    %cst_4 = arith.constant 0.000000e+00 : f32
    %10 = vector.broadcast %cst_4 : f32 to vector<16x1xf32>
    %11 = arith.select %9, %3, %10 : vector<16x1xi1>, vector<16x1xf32>
    %c0_5 = arith.constant 0 : index
    %c0_6 = arith.constant 0 : index
    %c0_7 = arith.constant 0 : index
    %12 = vector.load %arg4[%c0_5, %c0_6, %c0_7] : memref<1x16x1xf32, #tpu.memory_space<vmem>>, vector<1x16x1xf32>
    %13 = vector.shape_cast %12 : vector<1x16x1xf32> to vector<16x1xf32>
    %cst_8 = arith.constant 9.99999993E-9 : f32
    %14 = vector.broadcast %cst_8 : f32 to vector<16x1xf32>
    %15 = arith.addf %13, %14 : vector<16x1xf32>
    %16 = math.log %15 : vector<16x1xf32>
    %cst_9 = arith.constant 0.000000e+00 : f32
    %17 = vector.broadcast %cst_9 : f32 to vector<16x1xf32>
    %18 = arith.subf %17, %16 : vector<16x1xf32>
    %cst_10 = arith.constant 9.99999993E-9 : f32
    %19 = vector.broadcast %cst_10 : f32 to vector<16x1xf32>
    %20 = arith.addf %18, %19 : vector<16x1xf32>
    %21 = math.log %20 : vector<16x1xf32>
    %cst_11 = arith.constant 0.000000e+00 : f32
    %22 = vector.broadcast %cst_11 : f32 to vector<16x1xf32>
    %23 = arith.subf %22, %21 : vector<16x1xf32>
    %24 = arith.addf %11, %23 : vector<16x1xf32>
    %cst_12 = arith.constant 1.000000e+02 : f32
    %25 = vector.broadcast %cst_12 : f32 to vector<16x1xf32>
    %26 = arith.mulf %24, %25 : vector<16x1xf32>
    %c15_i32 = arith.constant 15 : i32
    %27 = tpu.dynamic_rotate %26 by %c15_i32 dim 0 : vector<16x1xf32>, i32 -> vector<16x1xf32>
    %c1_i32 = arith.constant 1 : i32
    %28 = tpu.dynamic_rotate %26 by %c1_i32 dim 0 : vector<16x1xf32>, i32 -> vector<16x1xf32>
    %c1_i32_13 = arith.constant 1 : i32
    %29 = vector.broadcast %c1_i32_13 : i32 to vector<16x1xi32>
    %30 = arith.andi %7, %29 : vector<16x1xi32>
    %c0_i32 = arith.constant 0 : i32
    %31 = vector.broadcast %c0_i32 : i32 to vector<16x1xi32>
    %32 = arith.cmpi eq, %30, %31 : vector<16x1xi32>
    %33 = arith.select %32, %27, %28 : vector<16x1xi1>, vector<16x1xf32>
    %34 = arith.maximumf %26, %33 : vector<16x1xf32>
    %c14_i32 = arith.constant 14 : i32
    %35 = tpu.dynamic_rotate %34 by %c14_i32 dim 0 : vector<16x1xf32>, i32 -> vector<16x1xf32>
    %c2_i32 = arith.constant 2 : i32
    %36 = tpu.dynamic_rotate %34 by %c2_i32 dim 0 : vector<16x1xf32>, i32 -> vector<16x1xf32>
    %c2_i32_14 = arith.constant 2 : i32
    %37 = vector.broadcast %c2_i32_14 : i32 to vector<16x1xi32>
    %38 = arith.andi %7, %37 : vector<16x1xi32>
    %c0_i32_15 = arith.constant 0 : i32
    %39 = vector.broadcast %c0_i32_15 : i32 to vector<16x1xi32>
    %40 = arith.cmpi eq, %38, %39 : vector<16x1xi32>
    %41 = arith.select %40, %35, %36 : vector<16x1xi1>, vector<16x1xf32>
    %42 = arith.maximumf %34, %41 : vector<16x1xf32>
    %43 = arith.subf %26, %42 : vector<16x1xf32>
    %44 = math.exp %43 : vector<16x1xf32>
    %c15_i32_16 = arith.constant 15 : i32
    %45 = tpu.dynamic_rotate %44 by %c15_i32_16 dim 0 : vector<16x1xf32>, i32 -> vector<16x1xf32>
    %c1_i32_17 = arith.constant 1 : i32
    %46 = tpu.dynamic_rotate %44 by %c1_i32_17 dim 0 : vector<16x1xf32>, i32 -> vector<16x1xf32>
    %c1_i32_18 = arith.constant 1 : i32
    %47 = vector.broadcast %c1_i32_18 : i32 to vector<16x1xi32>
    %48 = arith.andi %7, %47 : vector<16x1xi32>
    %c0_i32_19 = arith.constant 0 : i32
    %49 = vector.broadcast %c0_i32_19 : i32 to vector<16x1xi32>
    %50 = arith.cmpi eq, %48, %49 : vector<16x1xi32>
    %51 = arith.select %50, %45, %46 : vector<16x1xi1>, vector<16x1xf32>
    %52 = arith.addf %44, %51 : vector<16x1xf32>
    %c14_i32_20 = arith.constant 14 : i32
    %53 = tpu.dynamic_rotate %52 by %c14_i32_20 dim 0 : vector<16x1xf32>, i32 -> vector<16x1xf32>
    %c2_i32_21 = arith.constant 2 : i32
    %54 = tpu.dynamic_rotate %52 by %c2_i32_21 dim 0 : vector<16x1xf32>, i32 -> vector<16x1xf32>
    %c2_i32_22 = arith.constant 2 : i32
    %55 = vector.broadcast %c2_i32_22 : i32 to vector<16x1xi32>
    %56 = arith.andi %7, %55 : vector<16x1xi32>
    %c0_i32_23 = arith.constant 0 : i32
    %57 = vector.broadcast %c0_i32_23 : i32 to vector<16x1xi32>
    %58 = arith.cmpi eq, %56, %57 : vector<16x1xi32>
    %59 = arith.select %58, %53, %54 : vector<16x1xi1>, vector<16x1xf32>
    %60 = arith.addf %52, %59 : vector<16x1xf32>
    %61 = tpu.reciprocal %60 {approx = true} : vector<16x1xf32> -> vector<16x1xf32>
    %62 = arith.mulf %44, %61 : vector<16x1xf32>
    %c0_24 = arith.constant 0 : index
    %c0_25 = arith.constant 0 : index
    %c0_26 = arith.constant 0 : index
    %63 = vector.load %arg5[%c0_24, %c0_25, %c0_26] : memref<1x16x32xf32, #tpu.memory_space<vmem>>, vector<1x16x32xf32>
    %64 = vector.shape_cast %63 : vector<1x16x32xf32> to vector<16x32xf32>
    %65 = vector.broadcast %62 : vector<16x1xf32> to vector<16x32xf32>
    %66 = arith.mulf %65, %64 : vector<16x32xf32>
    %c0_27 = arith.constant 0 : index
    %c0_28 = arith.constant 0 : index
    %c0_29 = arith.constant 0 : index
    %67 = vector.load %arg6[%c0_27, %c0_28, %c0_29] : memref<1x16x32xf32, #tpu.memory_space<vmem>>, vector<1x16x32xf32>
    %68 = vector.shape_cast %67 : vector<1x16x32xf32> to vector<16x32xf32>
    %69 = vector.shape_cast %66 : vector<16x32xf32> to vector<1x16x32xf32>
    tpu.vector_store %arg6[%c0_27, %c0_28, %c0_29], %69 {strides = array<i32>} : memref<1x16x32xf32, #tpu.memory_space<vmem>>, vector<1x16x32xf32>,
    return
  }
  func.func @transform_0(%arg0: i32, %arg1: i32) -> (i32, i32, i32) {
    %c0_i32 = arith.constant 0 : i32
    %c0_i32_0 = arith.constant 0 : i32
    return %arg0, %arg1, %c0_i32 : i32, i32, i32
  }
  func.func @transform_1(%arg0: i32, %arg1: i32) -> (i32, i32) {
    %c0_i32 = arith.constant 0 : i32
    %c0_i32_0 = arith.constant 0 : i32
    %c0_i32_1 = arith.constant 0 : i32
    return %c0_i32, %c0_i32_0 : i32, i32
  }
  func.func @transform_2(%arg0: i32, %arg1: i32) -> (i32, i32, i32) {
    %c0_i32 = arith.constant 0 : i32
    %c0_i32_0 = arith.constant 0 : i32
    return %arg0, %arg1, %c0_i32 : i32, i32, i32
  }
  func.func @transform_3(%arg0: i32, %arg1: i32) -> (i32, i32, i32) {
    %c0_i32 = arith.constant 0 : i32
    %c0_i32_0 = arith.constant 0 : i32
    return %arg0, %arg1, %c0_i32 : i32, i32, i32
  }
  func.func @transform_4(%arg0: i32, %arg1: i32) -> (i32, i32, i32) {
    %c0_i32 = arith.constant 0 : i32
    %c0_i32_0 = arith.constant 0 : i32
    return %arg0, %arg1, %c0_i32 : i32, i32, i32
  }
}

</mosaic_0001>

<llo_original>
// kernel: tpu_custom_call.1
$region0: #{tpu_custom_call.1}
  #allocation0 [shape = 'u32[]', space=smem, size = 0x4, offset = 0x4, fixed_abs, tag = 'smem constant byte address 0x4 - core index']
  #allocation1 [shape = 'u32[144,128]{1,0:T(1,128)}', space=vmem, size = 0x12000, scoped, tag = 'internal scratch']
  %s0 = inlined_call_operand.vmem [shape: f32[2,10,512], index: 0, kind: input, shape index: {}]
  %s1 = inlined_call_operand.vmem [shape: f32[512,1], index: 1, kind: input, shape index: {}]
  %s2 = inlined_call_operand.vmem [shape: f32[2,16,1], index: 2, kind: input, shape index: {}]
  %s3 = inlined_call_operand.vmem [shape: f32[2,10,32], index: 3, kind: input, shape index: {}]
  %s4 = inlined_call_operand.vmem [shape: f32[2,10,32], index: 4, kind: output, shape index: {}]
  %s5 = sld [smem:[#allocation0]]
  $region49: #{tpu_custom_call.1} parent=0
    _
  %s7 = ssub.s32 1, %s5
  %s8 = scalar_select 0, %s7, %s5
  loop: start=0, step=1, limit=4
  $region2: #{tpu_custom_call.1} parent=0 // loop_pre_header
    _
  $region3: #{tpu_custom_call.1} parent=0 // loop_header
    %s10 = sphi 0, %s14
    %p11 = scmp.ge.s32.totalorder %s10, 4
    %s17 = sphi 0, %s29
    %s18 = sphi 0, %s25
    %s19 = sphi 0, %s17
    %s20 = sphi 0, %s18
    %s21 = sphi 0, %s19
    %s22 = sphi 0, %s20
    %s34 = sphi 0, %s36
    %s37 = sphi 0, %s34
    %s38 = sphi 0, %s37
    %s54 = sphi 0, %s38
    %s58 = sphi 0, %s58
    %s60 = sphi 0, %s58
    %s61 = sphi 0, %s60
    %s75 = sphi 0, %s61
    %s83 = sphi 0, %s85
    %s86 = sphi 0, %s83
    %s87 = sphi 0, %s86
    %s103 = sphi 0, %s87
    %s111 = sphi 0, %s113
    %s114 = sphi 0, %s111
    %s115 = sphi 0, %s114
    %s131 = sphi 0, %s115
    %s139 = sphi 0, %s141
    %s142 = sphi 0, %s139
    %s143 = sphi 0, %s142
    %s159 = sphi 0, %s143
  $region4: #{tpu_custom_call.1} parent=0 // loop_header_branch
    %13 = sbr.rel (%p11) target = $region8
  $region5: #{tpu_custom_call.1} parent=0 // loop_body
    %s15 = ssub.s32 %s10, 1
    %s16 = ssub.s32 %s10, 2
    %s23 = sadd.s32 1, %s18
    %p24 = scmp.ge.s32.totalorder %s23, 1
    %s25 = scalar_select %p24, 0, %s23
    %s26 = sadd.s32 1, %s17
    %s27 = scalar_select %p24, %s26, %s17
    %p28 = scmp.ge.s32.totalorder %s27, 2
    %s29 = scalar_select %p28, 0, %s27
    %s30 = ssub.s32 %s17, %s29
    %s31 = ssub.s32 %s18, %s25
    %s32 = sor.u32 %s30, %s31
    %p33 = scmp.eq.s32.totalorder %s32, 0
    %s35 = sadd.s32 %s34, 1
    %s36 = scalar_select %p33, %s34, %s35
    %p39 = pneg %p33
    %p40 = scmp.eq.s32.totalorder %s10, 1
    %p41 = por %p39, %p40
    %p42 = scmp.ne.s32.totalorder %s34, %s37
    %p43 = scmp.eq.s32.totalorder %s10, 0
    %p44 = por %p42, %p43
    %p45 = scmp.ne.s32.totalorder %s34, %s37
    %p46 = scmp.eq.s32.totalorder %s15, 1
    %p47 = por %p45, %p46
    %p48 = scmp.ne.s32.totalorder %s37, %s38
    %p49 = scmp.eq.s32.totalorder %s15, 0
    %p50 = por %p48, %p49
    %p51 = scmp.ne.s32.totalorder %s37, %s38
    %p52 = scmp.eq.s32.totalorder %s16, 1
    %p53 = por %p51, %p52
    %p55 = scmp.ne.s32.totalorder %s38, %s54
    %p56 = scmp.eq.s32.totalorder %s16, 0
    %p57 = por %p55, %p56
    %s59 = sadd.s32 %s58, 1
    %p62 = scmp.eq.s32.totalorder %s10, 1
    %p63 = scmp.ne.s32.totalorder %s58, %s60
    %p64 = scmp.eq.s32.totalorder %s10, 0
    %p65 = por %p63, %p64
    %p66 = scmp.ne.s32.totalorder %s58, %s60
    %p67 = scmp.eq.s32.totalorder %s15, 1
    %p68 = por %p66, %p67
    %p69 = scmp.ne.s32.totalorder %s60, %s61
    %p70 = scmp.eq.s32.totalorder %s15, 0
    %p71 = por %p69, %p70
    %p72 = scmp.ne.s32.totalorder %s60, %s61
    %p73 = scmp.eq.s32.totalorder %s16, 1
    %p74 = por %p72, %p73
    %p76 = scmp.ne.s32.totalorder %s61, %s75
    %p77 = scmp.eq.s32.totalorder %s16, 0
    %p78 = por %p76, %p77
    %s79 = ssub.s32 %s17, %s29
    %s80 = ssub.s32 %s18, %s25
    %s81 = sor.u32 %s79, %s80
    %p82 = scmp.eq.s32.totalorder %s81, 0
    %s84 = sadd.s32 %s83, 1
    %s85 = scalar_select %p82, %s83, %s84
    %p88 = pneg %p82
    %p89 = scmp.eq.s32.totalorder %s10, 1
    %p90 = por %p88, %p89
    %p91 = scmp.ne.s32.totalorder %s83, %s86
    %p92 = scmp.eq.s32.totalorder %s10, 0
    %p93 = por %p91, %p92
    %p94 = scmp.ne.s32.totalorder %s83, %s86
    %p95 = scmp.eq.s32.totalorder %s15, 1
    %p96 = por %p94, %p95
    %p97 = scmp.ne.s32.totalorder %s86, %s87
    %p98 = scmp.eq.s32.totalorder %s15, 0
    %p99 = por %p97, %p98
    %p100 = scmp.ne.s32.totalorder %s86, %s87
    %p101 = scmp.eq.s32.totalorder %s16, 1
    %p102 = por %p100, %p101
    %p104 = scmp.ne.s32.totalorder %s87, %s103
    %p105 = scmp.eq.s32.totalorder %s16, 0
    %p106 = por %p104, %p105
    %s107 = ssub.s32 %s17, %s29
    %s108 = ssub.s32 %s18, %s25
    %s109 = sor.u32 %s107, %s108
    %p110 = scmp.eq.s32.totalorder %s109, 0
    %s112 = sadd.s32 %s111, 1
    %s113 = scalar_select %p110, %s111, %s112
    %p116 = pneg %p110
    %p117 = scmp.eq.s32.totalorder %s10, 1
    %p118 = por %p116, %p117
    %p119 = scmp.ne.s32.totalorder %s111, %s114
    %p120 = scmp.eq.s32.totalorder %s10, 0
    %p121 = por %p119, %p120
    %p122 = scmp.ne.s32.totalorder %s111, %s114
    %p123 = scmp.eq.s32.totalorder %s15, 1
    %p124 = por %p122, %p123
    %p125 = scmp.ne.s32.totalorder %s114, %s115
    %p126 = scmp.eq.s32.totalorder %s15, 0
    %p127 = por %p125, %p126
    %p128 = scmp.ne.s32.totalorder %s114, %s115
    %p129 = scmp.eq.s32.totalorder %s16, 1
    %p130 = por %p128, %p129
    %p132 = scmp.ne.s32.totalorder %s115, %s131
    %p133 = scmp.eq.s32.totalorder %s16, 0
    %p134 = por %p132, %p133
    %s135 = ssub.s32 %s17, %s29
    %s136 = ssub.s32 %s18, %s25
    %s137 = sor.u32 %s135, %s136
    %p138 = scmp.eq.s32.totalorder %s137, 0
    %s140 = sadd.s32 %s139, 1
    %s141 = scalar_select %p138, %s139, %s140
    %p144 = pneg %p138
    %p145 = scmp.eq.s32.totalorder %s10, 1
    %p146 = por %p144, %p145
    %p147 = scmp.ne.s32.totalorder %s139, %s142
    %p148 = scmp.eq.s32.totalorder %s10, 0
    %p149 = por %p147, %p148
    %p150 = scmp.ne.s32.totalorder %s139, %s142
    %p151 = scmp.eq.s32.totalorder %s15, 1
    %p152 = por %p150, %p151
    %p153 = scmp.ne.s32.totalorder %s142, %s143
    %p154 = scmp.eq.s32.totalorder %s15, 0
    %p155 = por %p153, %p154
    %p156 = scmp.ne.s32.totalorder %s142, %s143
    %p157 = scmp.eq.s32.totalorder %s16, 1
    %p158 = por %p156, %p157
    %p160 = scmp.ne.s32.totalorder %s143, %s159
    %p161 = scmp.eq.s32.totalorder %s16, 0
    %p162 = por %p160, %p161
    %p163 = scmp.le.s32.totalorder 1, %s10
    %p164 = scmp.lt.s32.totalorder %s10, 3
    %p165 = pnand %p163, %p164
    %p166 = pneg %p165
    // Predicated region
    $region9: #{tpu_custom_call.1} parent=5 // pred_check
      _
    $region10: #{tpu_custom_call.1} parent=5 // pred_check_branch
      %168 = sbr.rel (%p165) target = $region12
    $region11: #{tpu_custom_call.1} parent=5 // pred_region
      %s169 = ssub.s32 %s10, 1
      // Predicated region
      $region13: #{tpu_custom_call.1} parent=11 // pred_check
        %p170 = pneg %p71
      $region14: #{tpu_custom_call.1} parent=11 // pred_check_branch
        %172 = sbr.rel (%p170) target = $region16
      $region15: #{tpu_custom_call.1} parent=11 // pred_region
        _
      $region16: #{tpu_custom_call.1} parent=11 // pred_fallthru
        _
    $region12: #{tpu_custom_call.1} parent=5 // pred_fallthru
      _
    %p173 = scmp.lt.s32.totalorder %s10, 2
    // Predicated region
    $region17: #{tpu_custom_call.1} parent=5 // pred_check
      %p174 = pneg %p173
    $region18: #{tpu_custom_call.1} parent=5 // pred_check_branch
      %176 = sbr.rel (%p174) target = $region20
    $region19: #{tpu_custom_call.1} parent=5 // pred_region
      // Predicated region
      $region21: #{tpu_custom_call.1} parent=19 // pred_check
        %p177 = pneg %p44
      $region22: #{tpu_custom_call.1} parent=19 // pred_check_branch
        %179 = sbr.rel (%p177) target = $region24
      $region23: #{tpu_custom_call.1} parent=19 // pred_region
        %s180 = smul.u32 2, %s18
        %p181 = scmp.lt.s32.totalorder %s17, 1
        %s182 = scalar_select %p181, %s17, 1
        %p183 = scmp.lt.s32.totalorder %s180, 1
        %s184 = scalar_select %p183, %s180, 1
        %s185 = smul.addr %s184, 4
        %s186 = smul.addr %s182, 8
        %s187 = sadd.s32 %s185, %s186
        %s188 = smul.addr %s187, 8
        %s189 = scalar_lea.vmem %s0, %s188
        %s190 = smul.u32 2, %s18
      $region24: #{tpu_custom_call.1} parent=19 // pred_fallthru
        _
      // Predicated region
      $region25: #{tpu_custom_call.1} parent=19 // pred_check
        %p191 = pneg %p93
      $region26: #{tpu_custom_call.1} parent=19 // pred_check_branch
        %193 = sbr.rel (%p191) target = $region28
      $region27: #{tpu_custom_call.1} parent=19 // pred_region
        %s194 = smul.u32 2, %s18
        %p195 = scmp.lt.s32.totalorder %s17, 1
        %s196 = scalar_select %p195, %s17, 1
        %p197 = scmp.lt.s32.totalorder %s194, 1
        %s198 = scalar_select %p197, %s194, 1
        %s199 = smul.addr %s196, 2
        %s200 = sadd.s32 %s198, %s199
        %s201 = smul.addr %s200, 8
        %s202 = scalar_lea.vmem %s2, %s201
        %s203 = smul.u32 2, %s18
      $region28: #{tpu_custom_call.1} parent=19 // pred_fallthru
        _
      // Predicated region
      $region29: #{tpu_custom_call.1} parent=19 // pred_check
        %p204 = pneg %p121
      $region30: #{tpu_custom_call.1} parent=19 // pred_check_branch
        %206 = sbr.rel (%p204) target = $region32
      $region31: #{tpu_custom_call.1} parent=19 // pred_region
        %s207 = smul.u32 2, %s18
        %p208 = scmp.lt.s32.totalorder %s17, 1
        %s209 = scalar_select %p208, %s17, 1
        %p210 = scmp.lt.s32.totalorder %s207, 1
        %s211 = scalar_select %p210, %s207, 1
        %s212 = smul.addr %s209, 2
        %s213 = sadd.s32 %s211, %s212
        %s214 = smul.addr %s213, 8
        %s215 = scalar_lea.vmem %s3, %s214
        %s216 = smul.u32 2, %s18
      $region32: #{tpu_custom_call.1} parent=19 // pred_fallthru
        _
    $region20: #{tpu_custom_call.1} parent=5 // pred_fallthru
      _
    %p217 = scmp.le.s32.totalorder 1, %s10
    %p218 = scmp.lt.s32.totalorder %s10, 3
    %p219 = pnand %p217, %p218
    %p220 = pneg %p219
    // Predicated region
    $region33: #{tpu_custom_call.1} parent=5 // pred_check
      _
    $region34: #{tpu_custom_call.1} parent=5 // pred_check_branch
      %222 = sbr.rel (%p219) target = $region36
    $region35: #{tpu_custom_call.1} parent=5 // pred_region
      %s223 = ssub.s32 %s10, 1
      %s224 = smul.u32 2, %s20
      %p225 = scmp.lt.s32.totalorder %s19, 1
      %s226 = scalar_select %p225, %s19, 1
      %p227 = scmp.lt.s32.totalorder %s224, 1
      %s228 = scalar_select %p227, %s224, 1
      %s229 = smul.addr %s228, 4
      %s230 = smul.addr %s226, 8
      %s231 = sadd.s32 %s229, %s230
      %s232 = smul.addr %s231, 8
      %s233 = scalar_lea.vmem %s0, %s232
      %p234 = pneg %p50
      %p235 = pneg %p47
      %p236 = pneg %p71
      %p237 = pneg %p68
      %s238 = smul.u32 2, %s20
      %p239 = scmp.lt.s32.totalorder %s19, 1
      %s240 = scalar_select %p239, %s19, 1
      %p241 = scmp.lt.s32.totalorder %s238, 1
      %s242 = scalar_select %p241, %s238, 1
      %s243 = smul.addr %s240, 2
      %s244 = sadd.s32 %s242, %s243
      %s245 = smul.addr %s244, 8
      %s246 = scalar_lea.vmem %s2, %s245
      %p247 = pneg %p99
      %p248 = pneg %p96
      %s249 = smul.u32 2, %s20
      %p250 = scmp.lt.s32.totalorder %s19, 1
      %s251 = scalar_select %p250, %s19, 1
      %p252 = scmp.lt.s32.totalorder %s249, 1
      %s253 = scalar_select %p252, %s249, 1
      %s254 = smul.addr %s251, 2
      %s255 = sadd.s32 %s253, %s254
      %s256 = smul.addr %s255, 8
      %s257 = scalar_lea.vmem %s3, %s256
      %p258 = pneg %p127
      %p259 = pneg %p124
      %p260 = pneg %p155
      %p261 = pneg %p152
      %s262 = smul.u32 2, %s20
      %p263 = scmp.lt.s32.totalorder %s19, 1
      %s264 = scalar_select %p263, %s19, 1
      %p265 = scmp.lt.s32.totalorder %s262, 1
      %s266 = scalar_select %p265, %s262, 1
      %s267 = smul.addr %s264, 2
      %s268 = sadd.s32 %s266, %s267
      %s269 = smul.addr %s268, 8
      %s270 = scalar_lea.vmem %s4, %s269
      %s271 = smul.u32 2, %s20
      %p272 = scmp.lt.s32.totalorder %s19, 1
      %s273 = scalar_select %p272, %s19, 1
      %p274 = scmp.lt.s32.totalorder %s271, 1
      %s275 = scalar_select %p274, %s271, 1
      %s276 = smul.addr %s275, 4
      %s277 = smul.addr %s273, 8
      %s278 = sadd.s32 %s276, %s277
      %s279 = smul.addr %s278, 8
      %s280 = scalar_lea.vmem %s0, %s279
      %s281 = smul.u32 2, %s20
      %s282 = smul.u32 2, %s20
      %p283 = scmp.lt.s32.totalorder %s19, 1
      %s284 = scalar_select %p283, %s19, 1
      %p285 = scmp.lt.s32.totalorder %s282, 1
      %s286 = scalar_select %p285, %s282, 1
      %s287 = smul.addr %s284, 2
      %s288 = sadd.s32 %s286, %s287
      %s289 = smul.addr %s288, 8
      %s290 = scalar_lea.vmem %s2, %s289
      %s291 = smul.u32 2, %s20
      %s292 = smul.u32 2, %s20
      %p293 = scmp.lt.s32.totalorder %s19, 1
      %s294 = scalar_select %p293, %s19, 1
      %p295 = scmp.lt.s32.totalorder %s292, 1
      %s296 = scalar_select %p295, %s292, 1
      %s297 = smul.addr %s294, 2
      %s298 = sadd.s32 %s296, %s297
      %s299 = smul.addr %s298, 8
      %s300 = scalar_lea.vmem %s3, %s299
      %s301 = smul.u32 2, %s20
      %s302 = smul.u32 2, %s20
      %p303 = scmp.lt.s32.totalorder %s19, 1
      %s304 = scalar_select %p303, %s19, 1
      %p305 = scmp.lt.s32.totalorder %s302, 1
      %s306 = scalar_select %p305, %s302, 1
      %s307 = smul.addr %s304, 2
      %s308 = sadd.s32 %s306, %s307
      %s309 = smul.addr %s308, 8
      %s310 = scalar_lea.vmem %s4, %s309
      %s311 = smul.u32 2, %s20
      %v312 = vld [vmem:[%s280] sm:$0xff]
      %v313 = vld [vmem:[%s280 + $0x8] sm:$0xff]
      %v314 = vld [vmem:[%s280 + $0x10] sm:$0xff]
      %v315 = vld [vmem:[%s280 + $0x18] sm:$0xff]
      %v316 = vld [vmem:[%s280 + $0x20] sm:$0xff]
      %v317 = vld [vmem:[%s280 + $0x28] sm:$0xff]
      %v318 = vld [vmem:[%s280 + $0x30] sm:$0xff]
      %v319 = vld [vmem:[%s280 + $0x38] sm:$0xff]
      %v320 = vld [vmem:[%s1] sm:$0xff]
      %v321 = vld [vmem:[%s1 + $0x8] sm:$0xff]
      %v322 = vld [vmem:[%s1 + $0x10] sm:$0xff]
      %v323 = vld [vmem:[%s1 + $0x18] sm:$0xff]
      %v324 = vld [vmem:[%s1 + $0x20] sm:$0xff]
      %v325 = vld [vmem:[%s1 + $0x28] sm:$0xff]
      %v326 = vld [vmem:[%s1 + $0x30] sm:$0xff]
      %v327 = vld [vmem:[%s1 + $0x38] sm:$0xff]
      %v328 = vld [vmem:[%s1 + $0x40] sm:$0xff]
      %v329 = vld [vmem:[%s1 + $0x48] sm:$0xff]
      %v330 = vld [vmem:[%s1 + $0x50] sm:$0xff]
      %v331 = vld [vmem:[%s1 + $0x58] sm:$0xff]
      %v332 = vld [vmem:[%s1 + $0x60] sm:$0xff]
      %v333 = vld [vmem:[%s1 + $0x68] sm:$0xff]
      %v334 = vld [vmem:[%s1 + $0x70] sm:$0xff]
      %v335 = vld [vmem:[%s1 + $0x78] sm:$0xff]
      %v336 = vld [vmem:[%s1 + $0x80] sm:$0xff]
      %v337 = vld [vmem:[%s1 + $0x88] sm:$0xff]
      %v338 = vld [vmem:[%s1 + $0x90] sm:$0xff]
      %v339 = vld [vmem:[%s1 + $0x98] sm:$0xff]
      %v340 = vld [vmem:[%s1 + $0xa0] sm:$0xff]
      %v341 = vld [vmem:[%s1 + $0xa8] sm:$0xff]
      %v342 = vld [vmem:[%s1 + $0xb0] sm:$0xff]
      %v343 = vld [vmem:[%s1 + $0xb8] sm:$0xff]
      %v344 = vld [vmem:[%s1 + $0xc0] sm:$0xff]
      %v345 = vld [vmem:[%s1 + $0xc8] sm:$0xff]
      %v346 = vld [vmem:[%s1 + $0xd0] sm:$0xff]
      %v347 = vld [vmem:[%s1 + $0xd8] sm:$0xff]
      %v348 = vld [vmem:[%s1 + $0xe0] sm:$0xff]
      %v349 = vld [vmem:[%s1 + $0xe8] sm:$0xff]
      %v350 = vld [vmem:[%s1 + $0xf0] sm:$0xff]
      %v351 = vld [vmem:[%s1 + $0xf8] sm:$0xff]
      %v352 = vld [vmem:[%s1 + $0x100] sm:$0xff]
      %v353 = vld [vmem:[%s1 + $0x108] sm:$0xff]
      %v354 = vld [vmem:[%s1 + $0x110] sm:$0xff]
      %v355 = vld [vmem:[%s1 + $0x118] sm:$0xff]
      %v356 = vld [vmem:[%s1 + $0x120] sm:$0xff]
      %v357 = vld [vmem:[%s1 + $0x128] sm:$0xff]
      %v358 = vld [vmem:[%s1 + $0x130] sm:$0xff]
      %v359 = vld [vmem:[%s1 + $0x138] sm:$0xff]
      %v360 = vld [vmem:[%s1 + $0x140] sm:$0xff]
      %v361 = vld [vmem:[%s1 + $0x148] sm:$0xff]
      %v362 = vld [vmem:[%s1 + $0x150] sm:$0xff]
      %v363 = vld [vmem:[%s1 + $0x158] sm:$0xff]
      %v364 = vld [vmem:[%s1 + $0x160] sm:$0xff]
      %v365 = vld [vmem:[%s1 + $0x168] sm:$0xff]
      %v366 = vld [vmem:[%s1 + $0x170] sm:$0xff]
      %v367 = vld [vmem:[%s1 + $0x178] sm:$0xff]
      %v368 = vld [vmem:[%s1 + $0x180] sm:$0xff]
      %v369 = vld [vmem:[%s1 + $0x188] sm:$0xff]
      %v370 = vld [vmem:[%s1 + $0x190] sm:$0xff]
      %v371 = vld [vmem:[%s1 + $0x198] sm:$0xff]
      %v372 = vld [vmem:[%s1 + $0x1a0] sm:$0xff]
      %v373 = vld [vmem:[%s1 + $0x1a8] sm:$0xff]
      %v374 = vld [vmem:[%s1 + $0x1b0] sm:$0xff]
      %v375 = vld [vmem:[%s1 + $0x1b8] sm:$0xff]
      %v376 = vld [vmem:[%s1 + $0x1c0] sm:$0xff]
      %v377 = vld [vmem:[%s1 + $0x1c8] sm:$0xff]
      %v378 = vld [vmem:[%s1 + $0x1d0] sm:$0xff]
      %v379 = vld [vmem:[%s1 + $0x1d8] sm:$0xff]
      %v380 = vld [vmem:[%s1 + $0x1e0] sm:$0xff]
      %v381 = vld [vmem:[%s1 + $0x1e8] sm:$0xff]
      %v382 = vld [vmem:[%s1 + $0x1f0] sm:$0xff]
      %v383 = vld [vmem:[%s1 + $0x1f8] sm:$0xff]
      %384 = vmatprep.subr.mxu0 0.0
      %v385 = vand.u32 %v320, 4294901760
      %386 = vmatpush1.msra.mxu0 %v385
      %387 = vmatprep.subr.mxu0 0.0
      %v388 = vand.u32 %v321, 4294901760
      %389 = vmatpush1.msra.mxu0 %v388
      %390 = vmatprep.subr.mxu0 0.0
      %v391 = vand.u32 %v322, 4294901760
      %392 = vmatpush1.msra.mxu0 %v391
      %393 = vmatprep.subr.mxu0 0.0
      %v394 = vand.u32 %v323, 4294901760
      %395 = vmatpush1.msra.mxu0 %v394
      %396 = vmatprep.subr.mxu0 0.0
      %v397 = vand.u32 %v324, 4294901760
      %398 = vmatpush1.msra.mxu0 %v397
      %399 = vmatprep.subr.mxu0 0.0
      %v400 = vand.u32 %v325, 4294901760
      %401 = vmatpush1.msra.mxu0 %v400
      %402 = vmatprep.subr.mxu0 0.0
      %v403 = vand.u32 %v326, 4294901760
      %404 = vmatpush1.msra.mxu0 %v403
      %405 = vmatprep.subr.mxu0 0.0
      %v406 = vand.u32 %v327, 4294901760
      %407 = vmatpush1.msra.mxu0 %v406
      %408 = vmatprep.subr.mxu0 0.0
      %v409 = vand.u32 %v328, 4294901760
      %410 = vmatpush1.msra.mxu0 %v409
      %411 = vmatprep.subr.mxu0 0.0
      %v412 = vand.u32 %v329, 4294901760
      %413 = vmatpush1.msra.mxu0 %v412
      %414 = vmatprep.subr.mxu0 0.0
      %v415 = vand.u32 %v330, 4294901760
      %416 = vmatpush1.msra.mxu0 %v415
      %417 = vmatprep.subr.mxu0 0.0
      %v418 = vand.u32 %v331, 4294901760
      %419 = vmatpush1.msra.mxu0 %v418
      %420 = vmatprep.subr.mxu0 0.0
      %v421 = vand.u32 %v332, 4294901760
      %422 = vmatpush1.msra.mxu0 %v421
      %423 = vmatprep.subr.mxu0 0.0
      %v424 = vand.u32 %v333, 4294901760
      %425 = vmatpush1.msra.mxu0 %v424
      %426 = vmatprep.subr.mxu0 0.0
      %v427 = vand.u32 %v334, 4294901760
      %428 = vmatpush1.msra.mxu0 %v427
      %429 = vmatprep.subr.mxu0 0.0
      %v430 = vand.u32 %v335, 4294901760
      %431 = vmatpush1.msra.mxu0 %v430
      %432 = vmatprep.subr.mxu0 0.0
      %v433 = vand.u32 %v336, 4294901760
      %434 = vmatpush1.msra.mxu0 %v433
      %435 = vmatprep.subr.mxu0 0.0
      %v436 = vand.u32 %v337, 4294901760
      %437 = vmatpush1.msra.mxu0 %v436
      %438 = vmatprep.subr.mxu0 0.0
      %v439 = vand.u32 %v338, 4294901760
      %440 = vmatpush1.msra.mxu0 %v439
      %441 = vmatprep.subr.mxu0 0.0
      %v442 = vand.u32 %v339, 4294901760
      %443 = vmatpush1.msra.mxu0 %v442
      %444 = vmatprep.subr.mxu0 0.0
      %v445 = vand.u32 %v340, 4294901760
      %446 = vmatpush1.msra.mxu0 %v445
      %447 = vmatprep.subr.mxu0 0.0
      %v448 = vand.u32 %v341, 4294901760
      %449 = vmatpush1.msra.mxu0 %v448
      %450 = vmatprep.subr.mxu0 0.0
      %v451 = vand.u32 %v342, 4294901760
      %452 = vmatpush1.msra.mxu0 %v451
      %453 = vmatprep.subr.mxu0 0.0
      %v454 = vand.u32 %v343, 4294901760
      %455 = vmatpush1.msra.mxu0 %v454
      %456 = vmatprep.subr.mxu0 0.0
      %v457 = vand.u32 %v344, 4294901760
      %458 = vmatpush1.msra.mxu0 %v457
      %459 = vmatprep.subr.mxu0 0.0
      %v460 = vand.u32 %v345, 4294901760
      %461 = vmatpush1.msra.mxu0 %v460
      %462 = vmatprep.subr.mxu0 0.0
      %v463 = vand.u32 %v346, 4294901760
      %464 = vmatpush1.msra.mxu0 %v463
      %465 = vmatprep.subr.mxu0 0.0
      %v466 = vand.u32 %v347, 4294901760
      %467 = vmatpush1.msra.mxu0 %v466
      %468 = vmatprep.subr.mxu0 0.0
      %v469 = vand.u32 %v348, 4294901760
      %470 = vmatpush1.msra.mxu0 %v469
      %471 = vmatprep.subr.mxu0 0.0
      %v472 = vand.u32 %v349, 4294901760
      %473 = vmatpush1.msra.mxu0 %v472
      %474 = vmatprep.subr.mxu0 0.0
      %v475 = vand.u32 %v350, 4294901760
      %476 = vmatpush1.msra.mxu0 %v475
      %477 = vmatprep.subr.mxu0 0.0
      %v478 = vand.u32 %v351, 4294901760
      %479 = vmatpush1.msra.mxu0 %v478
      %v480 = vand.u32 %v313, 4294901760
      %v481 = vsub.f32 %v313, %v480
      %v482 = vand.u32 %v481, 4294901760
      %v483 = vsub.f32 %v481, %v482
      %v484 = vand.u32 %v483, 4294901760
      %485 = vmatprep.mubr.f32.mxu0 %v484
      %v486 = vand.u32 %v312, 4294901760
      %v487 = vsub.f32 %v312, %v486
      %v488 = vand.u32 %v487, 4294901760
      %v489 = vsub.f32 %v487, %v488
      %v490 = vand.u32 %v489, 4294901760
      %491 = vmatmul.mubr.f32.gmra.mrb[0].mxu0 %v490
      %v492 = vpop.f32.mrb[0].mxu0
      %v493 = vadd.f32 0.0, %v492
      %v494 = vpop.f32.mrb[0].mxu0
      %v495 = vand.u32 %v317, 4294901760
      %v496 = vsub.f32 %v317, %v495
      %v497 = vand.u32 %v496, 4294901760
      %v498 = vsub.f32 %v496, %v497
      %v499 = vand.u32 %v498, 4294901760
      %500 = vmatprep.mubr.f32.mxu0 %v499
      %v501 = vand.u32 %v316, 4294901760
      %v502 = vsub.f32 %v316, %v501
      %v503 = vand.u32 %v502, 4294901760
      %v504 = vsub.f32 %v502, %v503
      %v505 = vand.u32 %v504, 4294901760
      %506 = vmatmul.mubr.f32.gmra.mrb[0].mxu0 %v505
      %v507 = vpop.f32.mrb[0].mxu0
      %v508 = vadd.f32 0.0, %v507
      %v509 = vpop.f32.mrb[0].mxu0
      %510 = vdwg.mxu0
      %511 = vmatprep.subr.mxu0 0.0
      %v512 = vand.u32 %v320, 4294901760
      %v513 = vsub.f32 %v320, %v512
      %v514 = vand.u32 %v513, 4294901760
      %v515 = vsub.f32 %v513, %v514
      %v516 = vand.u32 %v515, 4294901760
      %517 = vmatpush1.msra.mxu0 %v516
      %518 = vmatprep.subr.mxu0 0.0
      %v519 = vand.u32 %v321, 4294901760
      %v520 = vsub.f32 %v321, %v519
      %v521 = vand.u32 %v520, 4294901760
      %v522 = vsub.f32 %v520, %v521
      %v523 = vand.u32 %v522, 4294901760
      %524 = vmatpush1.msra.mxu0 %v523
      %525 = vmatprep.subr.mxu0 0.0
      %v526 = vand.u32 %v322, 4294901760
      %v527 = vsub.f32 %v322, %v526
      %v528 = vand.u32 %v527, 4294901760
      %v529 = vsub.f32 %v527, %v528
      %v530 = vand.u32 %v529, 4294901760
      %531 = vmatpush1.msra.mxu0 %v530
      %532 = vmatprep.subr.mxu0 0.0
      %v533 = vand.u32 %v323, 4294901760
      %v534 = vsub.f32 %v323, %v533
      %v535 = vand.u32 %v534, 4294901760
      %v536 = vsub.f32 %v534, %v535
      %v537 = vand.u32 %v536, 4294901760
      %538 = vmatpush1.msra.mxu0 %v537
      %539 = vmatprep.subr.mxu0 0.0
      %v540 = vand.u32 %v324, 4294901760
      %v541 = vsub.f32 %v324, %v540
      %v542 = vand.u32 %v541, 4294901760
      %v543 = vsub.f32 %v541, %v542
      %v544 = vand.u32 %v543, 4294901760
      %545 = vmatpush1.msra.mxu0 %v544
      %546 = vmatprep.subr.mxu0 0.0
      %v547 = vand.u32 %v325, 4294901760
      %v548 = vsub.f32 %v325, %v547
      %v549 = vand.u32 %v548, 4294901760
      %v550 = vsub.f32 %v548, %v549
      %v551 = vand.u32 %v550, 4294901760
      %552 = vmatpush1.msra.mxu0 %v551
      %553 = vmatprep.subr.mxu0 0.0
      %v554 = vand.u32 %v326, 4294901760
      %v555 = vsub.f32 %v326, %v554
      %v556 = vand.u32 %v555, 4294901760
      %v557 = vsub.f32 %v555, %v556
      %v558 = vand.u32 %v557, 4294901760
      %559 = vmatpush1.msra.mxu0 %v558
      %560 = vmatprep.subr.mxu0 0.0
      %v561 = vand.u32 %v327, 4294901760
      %v562 = vsub.f32 %v327, %v561
      %v563 = vand.u32 %v562, 4294901760
      %v564 = vsub.f32 %v562, %v563
      %v565 = vand.u32 %v564, 4294901760
      %566 = vmatpush1.msra.mxu0 %v565
      %567 = vmatprep.subr.mxu0 0.0
      %v568 = vand.u32 %v328, 4294901760
      %v569 = vsub.f32 %v328, %v568
      %v570 = vand.u32 %v569, 4294901760
      %v571 = vsub.f32 %v569, %v570
      %v572 = vand.u32 %v571, 4294901760
      %573 = vmatpush1.msra.mxu0 %v572
      %574 = vmatprep.subr.mxu0 0.0
      %v575 = vand.u32 %v329, 4294901760
      %v576 = vsub.f32 %v329, %v575
      %v577 = vand.u32 %v576, 4294901760
      %v578 = vsub.f32 %v576, %v577
      %v579 = vand.u32 %v578, 4294901760
      %580 = vmatpush1.msra.mxu0 %v579
      %581 = vmatprep.subr.mxu0 0.0
      %v582 = vand.u32 %v330, 4294901760
      %v583 = vsub.f32 %v330, %v582
      %v584 = vand.u32 %v583, 4294901760
      %v585 = vsub.f32 %v583, %v584
      %v586 = vand.u32 %v585, 4294901760
      %587 = vmatpush1.msra.mxu0 %v586
      %588 = vmatprep.subr.mxu0 0.0
      %v589 = vand.u32 %v331, 4294901760
      %v590 = vsub.f32 %v331, %v589
      %v591 = vand.u32 %v590, 4294901760
      %v592 = vsub.f32 %v590, %v591
      %v593 = vand.u32 %v592, 4294901760
      %594 = vmatpush1.msra.mxu0 %v593
      %595 = vmatprep.subr.mxu0 0.0
      %v596 = vand.u32 %v332, 4294901760
      %v597 = vsub.f32 %v332, %v596
      %v598 = vand.u32 %v597, 4294901760
      %v599 = vsub.f32 %v597, %v598
      %v600 = vand.u32 %v599, 4294901760
      %601 = vmatpush1.msra.mxu0 %v600
      %602 = vmatprep.subr.mxu0 0.0
      %v603 = vand.u32 %v333, 4294901760
      %v604 = vsub.f32 %v333, %v603
      %v605 = vand.u32 %v604, 4294901760
      %v606 = vsub.f32 %v604, %v605
      %v607 = vand.u32 %v606, 4294901760
      %608 = vmatpush1.msra.mxu0 %v607
      %609 = vmatprep.subr.mxu0 0.0
      %v610 = vand.u32 %v334, 4294901760
      %v611 = vsub.f32 %v334, %v610
      %v612 = vand.u32 %v611, 4294901760
      %v613 = vsub.f32 %v611, %v612
      %v614 = vand.u32 %v613, 4294901760
      %615 = vmatpush1.msra.mxu0 %v614
      %616 = vmatprep.subr.mxu0 0.0
      %v617 = vand.u32 %v335, 4294901760
      %v618 = vsub.f32 %v335, %v617
      %v619 = vand.u32 %v618, 4294901760
      %v620 = vsub.f32 %v618, %v619
      %v621 = vand.u32 %v620, 4294901760
      %622 = vmatpush1.msra.mxu0 %v621
      %623 = vmatprep.subr.mxu0 0.0
      %v624 = vand.u32 %v336, 4294901760
      %v625 = vsub.f32 %v336, %v624
      %v626 = vand.u32 %v625, 4294901760
      %v627 = vsub.f32 %v625, %v626
      %v628 = vand.u32 %v627, 4294901760
      %629 = vmatpush1.msra.mxu0 %v628
      %630 = vmatprep.subr.mxu0 0.0
      %v631 = vand.u32 %v337, 4294901760
      %v632 = vsub.f32 %v337, %v631
      %v633 = vand.u32 %v632, 4294901760
      %v634 = vsub.f32 %v632, %v633
      %v635 = vand.u32 %v634, 4294901760
      %636 = vmatpush1.msra.mxu0 %v635
      %637 = vmatprep.subr.mxu0 0.0
      %v638 = vand.u32 %v338, 4294901760
      %v639 = vsub.f32 %v338, %v638
      %v640 = vand.u32 %v639, 4294901760
      %v641 = vsub.f32 %v639, %v640
      %v642 = vand.u32 %v641, 4294901760
      %643 = vmatpush1.msra.mxu0 %v642
      %644 = vmatprep.subr.mxu0 0.0
      %v645 = vand.u32 %v339, 4294901760
      %v646 = vsub.f32 %v339, %v645
      %v647 = vand.u32 %v646, 4294901760
      %v648 = vsub.f32 %v646, %v647
      %v649 = vand.u32 %v648, 4294901760
      %650 = vmatpush1.msra.mxu0 %v649
      %651 = vmatprep.subr.mxu0 0.0
      %v652 = vand.u32 %v340, 4294901760
      %v653 = vsub.f32 %v340, %v652
      %v654 = vand.u32 %v653, 4294901760
      %v655 = vsub.f32 %v653, %v654
      %v656 = vand.u32 %v655, 4294901760
      %657 = vmatpush1.msra.mxu0 %v656
      %658 = vmatprep.subr.mxu0 0.0
      %v659 = vand.u32 %v341, 4294901760
      %v660 = vsub.f32 %v341, %v659
      %v661 = vand.u32 %v660, 4294901760
      %v662 = vsub.f32 %v660, %v661
      %v663 = vand.u32 %v662, 4294901760
      %664 = vmatpush1.msra.mxu0 %v663
      %665 = vmatprep.subr.mxu0 0.0
      %v666 = vand.u32 %v342, 4294901760
      %v667 = vsub.f32 %v342, %v666
      %v668 = vand.u32 %v667, 4294901760
      %v669 = vsub.f32 %v667, %v668
      %v670 = vand.u32 %v669, 4294901760
      %671 = vmatpush1.msra.mxu0 %v670
      %672 = vmatprep.subr.mxu0 0.0
      %v673 = vand.u32 %v343, 4294901760
      %v674 = vsub.f32 %v343, %v673
      %v675 = vand.u32 %v674, 4294901760
      %v676 = vsub.f32 %v674, %v675
      %v677 = vand.u32 %v676, 4294901760
      %678 = vmatpush1.msra.mxu0 %v677
      %679 = vmatprep.subr.mxu0 0.0
      %v680 = vand.u32 %v344, 4294901760
      %v681 = vsub.f32 %v344, %v680
      %v682 = vand.u32 %v681, 4294901760
      %v683 = vsub.f32 %v681, %v682
      %v684 = vand.u32 %v683, 4294901760
      %685 = vmatpush1.msra.mxu0 %v684
      %686 = vmatprep.subr.mxu0 0.0
      %v687 = vand.u32 %v345, 4294901760
      %v688 = vsub.f32 %v345, %v687
      %v689 = vand.u32 %v688, 4294901760
      %v690 = vsub.f32 %v688, %v689
      %v691 = vand.u32 %v690, 4294901760
      %692 = vmatpush1.msra.mxu0 %v691
      %693 = vmatprep.subr.mxu0 0.0
      %v694 = vand.u32 %v346, 4294901760
      %v695 = vsub.f32 %v346, %v694
      %v696 = vand.u32 %v695, 4294901760
      %v697 = vsub.f32 %v695, %v696
      %v698 = vand.u32 %v697, 4294901760
      %699 = vmatpush1.msra.mxu0 %v698
      %700 = vmatprep.subr.mxu0 0.0
      %v701 = vand.u32 %v347, 4294901760
      %v702 = vsub.f32 %v347, %v701
      %v703 = vand.u32 %v702, 4294901760
      %v704 = vsub.f32 %v702, %v703
      %v705 = vand.u32 %v704, 4294901760
      %706 = vmatpush1.msra.mxu0 %v705
      %707 = vmatprep.subr.mxu0 0.0
      %v708 = vand.u32 %v348, 4294901760
      %v709 = vsub.f32 %v348, %v708
      %v710 = vand.u32 %v709, 4294901760
      %v711 = vsub.f32 %v709, %v710
      %v712 = vand.u32 %v711, 4294901760
      %713 = vmatpush1.msra.mxu0 %v712
      %714 = vmatprep.subr.mxu0 0.0
      %v715 = vand.u32 %v349, 4294901760
      %v716 = vsub.f32 %v349, %v715
      %v717 = vand.u32 %v716, 4294901760
      %v718 = vsub.f32 %v716, %v717
      %v719 = vand.u32 %v718, 4294901760
      %720 = vmatpush1.msra.mxu0 %v719
      %721 = vmatprep.subr.mxu0 0.0
      %v722 = vand.u32 %v350, 4294901760
      %v723 = vsub.f32 %v350, %v722
      %v724 = vand.u32 %v723, 4294901760
      %v725 = vsub.f32 %v723, %v724
      %v726 = vand.u32 %v725, 4294901760
      %727 = vmatpush1.msra.mxu0 %v726
      %728 = vmatprep.subr.mxu0 0.0
      %v729 = vand.u32 %v351, 4294901760
      %v730 = vsub.f32 %v351, %v729
      %v731 = vand.u32 %v730, 4294901760
      %v732 = vsub.f32 %v730, %v731
      %v733 = vand.u32 %v732, 4294901760
      %734 = vmatpush1.msra.mxu0 %v733
      %v735 = vand.u32 %v313, 4294901760
      %736 = vmatprep.mubr.f32.mxu0 %v735
      %v737 = vand.u32 %v312, 4294901760
      %738 = vmatmul.mubr.f32.gmra.mrb[0].mxu0 %v737
      %v739 = vpop.f32.mrb[0].mxu0
      %v740 = vadd.f32 %v493, %v739
      %v741 = vpop.f32.mrb[0].mxu0
      %v742 = vand.u32 %v317, 4294901760
      %743 = vmatprep.mubr.f32.mxu0 %v742
      %v744 = vand.u32 %v316, 4294901760
      %745 = vmatmul.mubr.f32.gmra.mrb[0].mxu0 %v744
      %v746 = vpop.f32.mrb[0].mxu0
      %v747 = vadd.f32 %v508, %v746
      %v748 = vpop.f32.mrb[0].mxu0
      %749 = vdwg.mxu0
      %750 = vmatprep.subr.mxu0 0.0
      %v751 = vand.u32 %v320, 4294901760
      %v752 = vsub.f32 %v320, %v751
      %753 = vmatpush1.msra.mxu0 %v752
      %754 = vmatprep.subr.mxu0 0.0
      %v755 = vand.u32 %v321, 4294901760
      %v756 = vsub.f32 %v321, %v755
      %757 = vmatpush1.msra.mxu0 %v756
      %758 = vmatprep.subr.mxu0 0.0
      %v759 = vand.u32 %v322, 4294901760
      %v760 = vsub.f32 %v322, %v759
      %761 = vmatpush1.msra.mxu0 %v760
      %762 = vmatprep.subr.mxu0 0.0
      %v763 = vand.u32 %v323, 4294901760
      %v764 = vsub.f32 %v323, %v763
      %765 = vmatpush1.msra.mxu0 %v764
      %766 = vmatprep.subr.mxu0 0.0
      %v767 = vand.u32 %v324, 4294901760
      %v768 = vsub.f32 %v324, %v767
      %769 = vmatpush1.msra.mxu0 %v768
      %770 = vmatprep.subr.mxu0 0.0
      %v771 = vand.u32 %v325, 4294901760
      %v772 = vsub.f32 %v325, %v771
      %773 = vmatpush1.msra.mxu0 %v772
      %774 = vmatprep.subr.mxu0 0.0
      %v775 = vand.u32 %v326, 4294901760
      %v776 = vsub.f32 %v326, %v775
      %777 = vmatpush1.msra.mxu0 %v776
      %778 = vmatprep.subr.mxu0 0.0
      %v779 = vand.u32 %v327, 4294901760
      %v780 = vsub.f32 %v327, %v779
      %781 = vmatpush1.msra.mxu0 %v780
      %782 = vmatprep.subr.mxu0 0.0
      %v783 = vand.u32 %v328, 4294901760
      %v784 = vsub.f32 %v328, %v783
      %785 = vmatpush1.msra.mxu0 %v784
      %786 = vmatprep.subr.mxu0 0.0
      %v787 = vand.u32 %v329, 4294901760
      %v788 = vsub.f32 %v329, %v787
      %789 = vmatpush1.msra.mxu0 %v788
      %790 = vmatprep.subr.mxu0 0.0
      %v791 = vand.u32 %v330, 4294901760
      %v792 = vsub.f32 %v330, %v791
      %793 = vmatpush1.msra.mxu0 %v792
      %794 = vmatprep.subr.mxu0 0.0
      %v795 = vand.u32 %v331, 4294901760
      %v796 = vsub.f32 %v331, %v795
      %797 = vmatpush1.msra.mxu0 %v796
      %798 = vmatprep.subr.mxu0 0.0
      %v799 = vand.u32 %v332, 4294901760
      %v800 = vsub.f32 %v332, %v799
      %801 = vmatpush1.msra.mxu0 %v800
      %802 = vmatprep.subr.mxu0 0.0
      %v803 = vand.u32 %v333, 4294901760
      %v804 = vsub.f32 %v333, %v803
      %805 = vmatpush1.msra.mxu0 %v804
      %806 = vmatprep.subr.mxu0 0.0
      %v807 = vand.u32 %v334, 4294901760
      %v808 = vsub.f32 %v334, %v807
      %809 = vmatpush1.msra.mxu0 %v808
      %810 = vmatprep.subr.mxu0 0.0
      %v811 = vand.u32 %v335, 4294901760
      %v812 = vsub.f32 %v335, %v811
      %813 = vmatpush1.msra.mxu0 %v812
      %814 = vmatprep.subr.mxu0 0.0
      %v815 = vand.u32 %v336, 4294901760
      %v816 = vsub.f32 %v336, %v815
      %817 = vmatpush1.msra.mxu0 %v816
      %818 = vmatprep.subr.mxu0 0.0
      %v819 = vand.u32 %v337, 4294901760
      %v820 = vsub.f32 %v337, %v819
      %821 = vmatpush1.msra.mxu0 %v820
      %822 = vmatprep.subr.mxu0 0.0
      %v823 = vand.u32 %v338, 4294901760
      %v824 = vsub.f32 %v338, %v823
      %825 = vmatpush1.msra.mxu0 %v824
      %826 = vmatprep.subr.mxu0 0.0
      %v827 = vand.u32 %v339, 4294901760
      %v828 = vsub.f32 %v339, %v827
      %829 = vmatpush1.msra.mxu0 %v828
      %830 = vmatprep.subr.mxu0 0.0
      %v831 = vand.u32 %v340, 4294901760
      %v832 = vsub.f32 %v340, %v831
      %833 = vmatpush1.msra.mxu0 %v832
      %834 = vmatprep.subr.mxu0 0.0
      %v835 = vand.u32 %v341, 4294901760
      %v836 = vsub.f32 %v341, %v835
      %837 = vmatpush1.msra.mxu0 %v836
      %838 = vmatprep.subr.mxu0 0.0
      %v839 = vand.u32 %v342, 4294901760
      %v840 = vsub.f32 %v342, %v839
      %841 = vmatpush1.msra.mxu0 %v840
      %842 = vmatprep.subr.mxu0 0.0
      %v843 = vand.u32 %v343, 4294901760
      %v844 = vsub.f32 %v343, %v843
      %845 = vmatpush1.msra.mxu0 %v844
      %846 = vmatprep.subr.mxu0 0.0
      %v847 = vand.u32 %v344, 4294901760
      %v848 = vsub.f32 %v344, %v847
      %849 = vmatpush1.msra.mxu0 %v848
      %850 = vmatprep.subr.mxu0 0.0
      %v851 = vand.u32 %v345, 4294901760
      %v852 = vsub.f32 %v345, %v851
      %853 = vmatpush1.msra.mxu0 %v852
      %854 = vmatprep.subr.mxu0 0.0
      %v855 = vand.u32 %v346, 4294901760
      %v856 = vsub.f32 %v346, %v855
      %857 = vmatpush1.msra.mxu0 %v856
      %858 = vmatprep.subr.mxu0 0.0
      %v859 = vand.u32 %v347, 4294901760
      %v860 = vsub.f32 %v347, %v859
      %861 = vmatpush1.msra.mxu0 %v860
      %862 = vmatprep.subr.mxu0 0.0
      %v863 = vand.u32 %v348, 4294901760
      %v864 = vsub.f32 %v348, %v863
      %865 = vmatpush1.msra.mxu0 %v864
      %866 = vmatprep.subr.mxu0 0.0
      %v867 = vand.u32 %v349, 4294901760
      %v868 = vsub.f32 %v349, %v867
      %869 = vmatpush1.msra.mxu0 %v868
      %870 = vmatprep.subr.mxu0 0.0
      %v871 = vand.u32 %v350, 4294901760
      %v872 = vsub.f32 %v350, %v871
      %873 = vmatpush1.msra.mxu0 %v872
      %874 = vmatprep.subr.mxu0 0.0
      %v875 = vand.u32 %v351, 4294901760
      %v876 = vsub.f32 %v351, %v875
      %877 = vmatpush1.msra.mxu0 %v876
      %v878 = vand.u32 %v313, 4294901760
      %v879 = vsub.f32 %v313, %v878
      %880 = vmatprep.mubr.f32.mxu0 %v879
      %v881 = vand.u32 %v312, 4294901760
      %v882 = vsub.f32 %v312, %v881
      %883 = vmatmul.mubr.f32.gmra.mrb[0].mxu0 %v882
      %v884 = vpop.f32.mrb[0].mxu0
      %v885 = vadd.f32 %v740, %v884
      %v886 = vpop.f32.mrb[0].mxu0
      %v887 = vand.u32 %v317, 4294901760
      %v888 = vsub.f32 %v317, %v887
      %889 = vmatprep.mubr.f32.mxu0 %v888
      %v890 = vand.u32 %v316, 4294901760
      %v891 = vsub.f32 %v316, %v890
      %892 = vmatmul.mubr.f32.gmra.mrb[0].mxu0 %v891
      %v893 = vpop.f32.mrb[0].mxu0
      %v894 = vadd.f32 %v747, %v893
      %v895 = vpop.f32.mrb[0].mxu0
      %896 = vdwg.mxu0
      %897 = vmatprep.subr.mxu0 0.0
      %v898 = vand.u32 %v320, 4294901760
      %899 = vmatpush1.msra.mxu0 %v898
      %900 = vmatprep.subr.mxu0 0.0
      %v901 = vand.u32 %v321, 4294901760
      %902 = vmatpush1.msra.mxu0 %v901
      %903 = vmatprep.subr.mxu0 0.0
      %v904 = vand.u32 %v322, 4294901760
      %905 = vmatpush1.msra.mxu0 %v904
      %906 = vmatprep.subr.mxu0 0.0
      %v907 = vand.u32 %v323, 4294901760
      %908 = vmatpush1.msra.mxu0 %v907
      %909 = vmatprep.subr.mxu0 0.0
      %v910 = vand.u32 %v324, 4294901760
      %911 = vmatpush1.msra.mxu0 %v910
      %912 = vmatprep.subr.mxu0 0.0
      %v913 = vand.u32 %v325, 4294901760
      %914 = vmatpush1.msra.mxu0 %v913
      %915 = vmatprep.subr.mxu0 0.0
      %v916 = vand.u32 %v326, 4294901760
      %917 = vmatpush1.msra.mxu0 %v916
      %918 = vmatprep.subr.mxu0 0.0
      %v919 = vand.u32 %v327, 4294901760
      %920 = vmatpush1.msra.mxu0 %v919
      %921 = vmatprep.subr.mxu0 0.0
      %v922 = vand.u32 %v328, 4294901760
      %923 = vmatpush1.msra.mxu0 %v922
      %924 = vmatprep.subr.mxu0 0.0
      %v925 = vand.u32 %v329, 4294901760
      %926 = vmatpush1.msra.mxu0 %v925
      %927 = vmatprep.subr.mxu0 0.0
      %v928 = vand.u32 %v330, 4294901760
      %929 = vmatpush1.msra.mxu0 %v928
      %930 = vmatprep.subr.mxu0 0.0
      %v931 = vand.u32 %v331, 4294901760
      %932 = vmatpush1.msra.mxu0 %v931
      %933 = vmatprep.subr.mxu0 0.0
      %v934 = vand.u32 %v332, 4294901760
      %935 = vmatpush1.msra.mxu0 %v934
      %936 = vmatprep.subr.mxu0 0.0
      %v937 = vand.u32 %v333, 4294901760
      %938 = vmatpush1.msra.mxu0 %v937
      %939 = vmatprep.subr.mxu0 0.0
      %v940 = vand.u32 %v334, 4294901760
      %941 = vmatpush1.msra.mxu0 %v940
      %942 = vmatprep.subr.mxu0 0.0
      %v943 = vand.u32 %v335, 4294901760
      %944 = vmatpush1.msra.mxu0 %v943
      %945 = vmatprep.subr.mxu0 0.0
      %v946 = vand.u32 %v336, 4294901760
      %947 = vmatpush1.msra.mxu0 %v946
      %948 = vmatprep.subr.mxu0 0.0
      %v949 = vand.u32 %v337, 4294901760
      %950 = vmatpush1.msra.mxu0 %v949
      %951 = vmatprep.subr.mxu0 0.0
      %v952 = vand.u32 %v338, 4294901760
      %953 = vmatpush1.msra.mxu0 %v952
      %954 = vmatprep.subr.mxu0 0.0
      %v955 = vand.u32 %v339, 4294901760
      %956 = vmatpush1.msra.mxu0 %v955
      %957 = vmatprep.subr.mxu0 0.0
      %v958 = vand.u32 %v340, 4294901760
      %959 = vmatpush1.msra.mxu0 %v958
      %960 = vmatprep.subr.mxu0 0.0
      %v961 = vand.u32 %v341, 4294901760
      %962 = vmatpush1.msra.mxu0 %v961
      %963 = vmatprep.subr.mxu0 0.0
      %v964 = vand.u32 %v342, 4294901760
      %965 = vmatpush1.msra.mxu0 %v964
      %966 = vmatprep.subr.mxu0 0.0
      %v967 = vand.u32 %v343, 4294901760
      %968 = vmatpush1.msra.mxu0 %v967
      %969 = vmatprep.subr.mxu0 0.0
      %v970 = vand.u32 %v344, 4294901760
      %971 = vmatpush1.msra.mxu0 %v970
      %972 = vmatprep.subr.mxu0 0.0
      %v973 = vand.u32 %v345, 4294901760
      %974 = vmatpush1.msra.mxu0 %v973
      %975 = vmatprep.subr.mxu0 0.0
      %v976 = vand.u32 %v346, 4294901760
      %977 = vmatpush1.msra.mxu0 %v976
      %978 = vmatprep.subr.mxu0 0.0
      %v979 = vand.u32 %v347, 4294901760
      %980 = vmatpush1.msra.mxu0 %v979
      %981 = vmatprep.subr.mxu0 0.0
      %v982 = vand.u32 %v348, 4294901760
      %983 = vmatpush1.msra.mxu0 %v982
      %984 = vmatprep.subr.mxu0 0.0
      %v985 = vand.u32 %v349, 4294901760
      %986 = vmatpush1.msra.mxu0 %v985
      %987 = vmatprep.subr.mxu0 0.0
      %v988 = vand.u32 %v350, 4294901760
      %989 = vmatpush1.msra.mxu0 %v988
      %990 = vmatprep.subr.mxu0 0.0
      %v991 = vand.u32 %v351, 4294901760
      %992 = vmatpush1.msra.mxu0 %v991
      %v993 = vand.u32 %v313, 4294901760
      %v994 = vsub.f32 %v313, %v993
      %v995 = vand.u32 %v994, 4294901760
      %996 = vmatprep.mubr.f32.mxu0 %v995
      %v997 = vand.u32 %v312, 4294901760
      %v998 = vsub.f32 %v312, %v997
      %v999 = vand.u32 %v998, 4294901760
      %1000 = vmatmul.mubr.f32.gmra.mrb[0].mxu0 %v999
      %v1001 = vpop.f32.mrb[0].mxu0
      %v1002 = vadd.f32 %v885, %v1001
      %v1003 = vpop.f32.mrb[0].mxu0
      %v1004 = vand.u32 %v317, 4294901760
      %v1005 = vsub.f32 %v317, %v1004
      %v1006 = vand.u32 %v1005, 4294901760
      %1007 = vmatprep.mubr.f32.mxu0 %v1006
      %v1008 = vand.u32 %v316, 4294901760
      %v1009 = vsub.f32 %v316, %v1008
      %v1010 = vand.u32 %v1009, 4294901760
      %1011 = vmatmul.mubr.f32.gmra.mrb[0].mxu0 %v1010
      %v1012 = vpop.f32.mrb[0].mxu0
      %v1013 = vadd.f32 %v894, %v1012
      %v1014 = vpop.f32.mrb[0].mxu0
      %1015 = vdwg.mxu0
      %1016 = vmatprep.subr.mxu0 0.0
      %v1017 = vand.u32 %v320, 4294901760
      %v1018 = vsub.f32 %v320, %v1017
      %v1019 = vand.u32 %v1018, 4294901760
      %1020 = vmatpush1.msra.mxu0 %v1019
      %1021 = vmatprep.subr.mxu0 0.0
      %v1022 = vand.u32 %v321, 4294901760
      %v1023 = vsub.f32 %v321, %v1022
      %v1024 = vand.u32 %v1023, 4294901760
      %1025 = vmatpush1.msra.mxu0 %v1024
      %1026 = vmatprep.subr.mxu0 0.0
      %v1027 = vand.u32 %v322, 4294901760
      %v1028 = vsub.f32 %v322, %v1027
      %v1029 = vand.u32 %v1028, 4294901760
      %1030 = vmatpush1.msra.mxu0 %v1029
      %1031 = vmatprep.subr.mxu0 0.0
      %v1032 = vand.u32 %v323, 4294901760
      %v1033 = vsub.f32 %v323, %v1032
      %v1034 = vand.u32 %v1033, 4294901760
      %1035 = vmatpush1.msra.mxu0 %v1034
      %1036 = vmatprep.subr.mxu0 0.0
      %v1037 = vand.u32 %v324, 4294901760
      %v1038 = vsub.f32 %v324, %v1037
      %v1039 = vand.u32 %v1038, 4294901760
      %1040 = vmatpush1.msra.mxu0 %v1039
      %1041 = vmatprep.subr.mxu0 0.0
      %v1042 = vand.u32 %v325, 4294901760
      %v1043 = vsub.f32 %v325, %v1042
      %v1044 = vand.u32 %v1043, 4294901760
      %1045 = vmatpush1.msra.mxu0 %v1044
      %1046 = vmatprep.subr.mxu0 0.0
      %v1047 = vand.u32 %v326, 4294901760
      %v1048 = vsub.f32 %v326, %v1047
      %v1049 = vand.u32 %v1048, 4294901760
      %1050 = vmatpush1.msra.mxu0 %v1049
      %1051 = vmatprep.subr.mxu0 0.0
      %v1052 = vand.u32 %v327, 4294901760
      %v1053 = vsub.f32 %v327, %v1052
      %v1054 = vand.u32 %v1053, 4294901760
      %1055 = vmatpush1.msra.mxu0 %v1054
      %1056 = vmatprep.subr.mxu0 0.0
      %v1057 = vand.u32 %v328, 4294901760
      %v1058 = vsub.f32 %v328, %v1057
      %v1059 = vand.u32 %v1058, 4294901760
      %1060 = vmatpush1.msra.mxu0 %v1059
      %1061 = vmatprep.subr.mxu0 0.0
      %v1062 = vand.u32 %v329, 4294901760
      %v1063 = vsub.f32 %v329, %v1062
      %v1064 = vand.u32 %v1063, 4294901760
      %1065 = vmatpush1.msra.mxu0 %v1064
      %1066 = vmatprep.subr.mxu0 0.0
      %v1067 = vand.u32 %v330, 4294901760
      %v1068 = vsub.f32 %v330, %v1067
      %v1069 = vand.u32 %v1068, 4294901760
      %1070 = vmatpush1.msra.mxu0 %v1069
      %1071 = vmatprep.subr.mxu0 0.0
      %v1072 = vand.u32 %v331, 4294901760
      %v1073 = vsub.f32 %v331, %v1072
      %v1074 = vand.u32 %v1073, 4294901760
      %1075 = vmatpush1.msra.mxu0 %v1074
      %1076 = vmatprep.subr.mxu0 0.0
      %v1077 = vand.u32 %v332, 4294901760
      %v1078 = vsub.f32 %v332, %v1077
      %v1079 = vand.u32 %v1078, 4294901760
      %1080 = vmatpush1.msra.mxu0 %v1079
      %1081 = vmatprep.subr.mxu0 0.0
      %v1082 = vand.u32 %v333, 4294901760
      %v1083 = vsub.f32 %v333, %v1082
      %v1084 = vand.u32 %v1083, 4294901760
      %1085 = vmatpush1.msra.mxu0 %v1084
      %1086 = vmatprep.subr.mxu0 0.0
      %v1087 = vand.u32 %v334, 4294901760
      %v1088 = vsub.f32 %v334, %v1087
      %v1089 = vand.u32 %v1088, 4294901760
      %1090 = vmatpush1.msra.mxu0 %v1089
      %1091 = vmatprep.subr.mxu0 0.0
      %v1092 = vand.u32 %v335, 4294901760
      %v1093 = vsub.f32 %v335, %v1092
      %v1094 = vand.u32 %v1093, 4294901760
      %1095 = vmatpush1.msra.mxu0 %v1094
      %1096 = vmatprep.subr.mxu0 0.0
      %v1097 = vand.u32 %v336, 4294901760
      %v1098 = vsub.f32 %v336, %v1097
      %v1099 = vand.u32 %v1098, 4294901760
      %1100 = vmatpush1.msra.mxu0 %v1099
      %1101 = vmatprep.subr.mxu0 0.0
      %v1102 = vand.u32 %v337, 4294901760
      %v1103 = vsub.f32 %v337, %v1102
      %v1104 = vand.u32 %v1103, 4294901760
      %1105 = vmatpush1.msra.mxu0 %v1104
      %1106 = vmatprep.subr.mxu0 0.0
      %v1107 = vand.u32 %v338, 4294901760
      %v1108 = vsub.f32 %v338, %v1107
      %v1109 = vand.u32 %v1108, 4294901760
      %1110 = vmatpush1.msra.mxu0 %v1109
      %1111 = vmatprep.subr.mxu0 0.0
      %v1112 = vand.u32 %v339, 4294901760
      %v1113 = vsub.f32 %v339, %v1112
      %v1114 = vand.u32 %v1113, 4294901760
      %1115 = vmatpush1.msra.mxu0 %v1114
      %1116 = vmatprep.subr.mxu0 0.0
      %v1117 = vand.u32 %v340, 4294901760
      %v1118 = vsub.f32 %v340, %v1117
      %v1119 = vand.u32 %v1118, 4294901760
      %1120 = vmatpush1.msra.mxu0 %v1119
      %1121 = vmatprep.subr.mxu0 0.0
      %v1122 = vand.u32 %v341, 4294901760
      %v1123 = vsub.f32 %v341, %v1122
      %v1124 = vand.u32 %v1123, 4294901760
      %1125 = vmatpush1.msra.mxu0 %v1124
      %1126 = vmatprep.subr.mxu0 0.0
      %v1127 = vand.u32 %v342, 4294901760
      %v1128 = vsub.f32 %v342, %v1127
      %v1129 = vand.u32 %v1128, 4294901760
      %1130 = vmatpush1.msra.mxu0 %v1129
      %1131 = vmatprep.subr.mxu0 0.0
      %v1132 = vand.u32 %v343, 4294901760
      %v1133 = vsub.f32 %v343, %v1132
      %v1134 = vand.u32 %v1133, 4294901760
      %1135 = vmatpush1.msra.mxu0 %v1134
      %1136 = vmatprep.subr.mxu0 0.0
      %v1137 = vand.u32 %v344, 4294901760
      %v1138 = vsub.f32 %v344, %v1137
      %v1139 = vand.u32 %v1138, 4294901760
      %1140 = vmatpush1.msra.mxu0 %v1139
      %1141 = vmatprep.subr.mxu0 0.0
      %v1142 = vand.u32 %v345, 4294901760
      %v1143 = vsub.f32 %v345, %v1142
      %v1144 = vand.u32 %v1143, 4294901760
      %1145 = vmatpush1.msra.mxu0 %v1144
      %1146 = vmatprep.subr.mxu0 0.0
      %v1147 = vand.u32 %v346, 4294901760
      %v1148 = vsub.f32 %v346, %v1147
      %v1149 = vand.u32 %v1148, 4294901760
      %1150 = vmatpush1.msra.mxu0 %v1149
      %1151 = vmatprep.subr.mxu0 0.0
      %v1152 = vand.u32 %v347, 4294901760
      %v1153 = vsub.f32 %v347, %v1152
      %v1154 = vand.u32 %v1153, 4294901760
      %1155 = vmatpush1.msra.mxu0 %v1154
      %1156 = vmatprep.subr.mxu0 0.0
      %v1157 = vand.u32 %v348, 4294901760
      %v1158 = vsub.f32 %v348, %v1157
      %v1159 = vand.u32 %v1158, 4294901760
      %1160 = vmatpush1.msra.mxu0 %v1159
      %1161 = vmatprep.subr.mxu0 0.0
      %v1162 = vand.u32 %v349, 4294901760
      %v1163 = vsub.f32 %v349, %v1162
      %v1164 = vand.u32 %v1163, 4294901760
      %1165 = vmatpush1.msra.mxu0 %v1164
      %1166 = vmatprep.subr.mxu0 0.0
      %v1167 = vand.u32 %v350, 4294901760
      %v1168 = vsub.f32 %v350, %v1167
      %v1169 = vand.u32 %v1168, 4294901760
      %1170 = vmatpush1.msra.mxu0 %v1169
      %1171 = vmatprep.subr.mxu0 0.0
      %v1172 = vand.u32 %v351, 4294901760
      %v1173 = vsub.f32 %v351, %v1172
      %v1174 = vand.u32 %v1173, 4294901760
      %1175 = vmatpush1.msra.mxu0 %v1174
      %v1176 = vand.u32 %v313, 4294901760
      %1177 = vmatprep.mubr.f32.mxu0 %v1176
      %v1178 = vand.u32 %v312, 4294901760
      %1179 = vmatmul.mubr.f32.gmra.mrb[0].mxu0 %v1178
      %v1180 = vpop.f32.mrb[0].mxu0
      %v1181 = vadd.f32 %v1002, %v1180
      %v1182 = vpop.f32.mrb[0].mxu0
      %v1183 = vand.u32 %v317, 4294901760
      %1184 = vmatprep.mubr.f32.mxu0 %v1183
      %v1185 = vand.u32 %v316, 4294901760
      %1186 = vmatmul.mubr.f32.gmra.mrb[0].mxu0 %v1185
      %v1187 = vpop.f32.mrb[0].mxu0
      %v1188 = vadd.f32 %v1013, %v1187
      %v1189 = vpop.f32.mrb[0].mxu0
      %1190 = vdwg.mxu0
      %1191 = vmatprep.subr.mxu0 0.0
      %v1192 = vand.u32 %v320, 4294901760
      %1193 = vmatpush1.msra.mxu0 %v1192
      %1194 = vmatprep.subr.mxu0 0.0
      %v1195 = vand.u32 %v321, 4294901760
      %1196 = vmatpush1.msra.mxu0 %v1195
      %1197 = vmatprep.subr.mxu0 0.0
      %v1198 = vand.u32 %v322, 4294901760
      %1199 = vmatpush1.msra.mxu0 %v1198
      %1200 = vmatprep.subr.mxu0 0.0
      %v1201 = vand.u32 %v323, 4294901760
      %1202 = vmatpush1.msra.mxu0 %v1201
      %1203 = vmatprep.subr.mxu0 0.0
      %v1204 = vand.u32 %v324, 4294901760
      %1205 = vmatpush1.msra.mxu0 %v1204
      %1206 = vmatprep.subr.mxu0 0.0
      %v1207 = vand.u32 %v325, 4294901760
      %1208 = vmatpush1.msra.mxu0 %v1207
      %1209 = vmatprep.subr.mxu0 0.0
      %v1210 = vand.u32 %v326, 4294901760
      %1211 = vmatpush1.msra.mxu0 %v1210
      %1212 = vmatprep.subr.mxu0 0.0
      %v1213 = vand.u32 %v327, 4294901760
      %1214 = vmatpush1.msra.mxu0 %v1213
      %1215 = vmatprep.subr.mxu0 0.0
      %v1216 = vand.u32 %v328, 4294901760
      %1217 = vmatpush1.msra.mxu0 %v1216
      %1218 = vmatprep.subr.mxu0 0.0
      %v1219 = vand.u32 %v329, 4294901760
      %1220 = vmatpush1.msra.mxu0 %v1219
      %1221 = vmatprep.subr.mxu0 0.0
      %v1222 = vand.u32 %v330, 4294901760
      %1223 = vmatpush1.msra.mxu0 %v1222
      %1224 = vmatprep.subr.mxu0 0.0
      %v1225 = vand.u32 %v331, 4294901760
      %1226 = vmatpush1.msra.mxu0 %v1225
      %1227 = vmatprep.subr.mxu0 0.0
      %v1228 = vand.u32 %v332, 4294901760
      %1229 = vmatpush1.msra.mxu0 %v1228
      %1230 = vmatprep.subr.mxu0 0.0
      %v1231 = vand.u32 %v333, 4294901760
      %1232 = vmatpush1.msra.mxu0 %v1231
      %1233 = vmatprep.subr.mxu0 0.0
      %v1234 = vand.u32 %v334, 4294901760
      %1235 = vmatpush1.msra.mxu0 %v1234
      %1236 = vmatprep.subr.mxu0 0.0
      %v1237 = vand.u32 %v335, 4294901760
      %1238 = vmatpush1.msra.mxu0 %v1237
      %1239 = vmatprep.subr.mxu0 0.0
      %v1240 = vand.u32 %v336, 4294901760
      %1241 = vmatpush1.msra.mxu0 %v1240
      %1242 = vmatprep.subr.mxu0 0.0
      %v1243 = vand.u32 %v337, 4294901760
      %1244 = vmatpush1.msra.mxu0 %v1243
      %1245 = vmatprep.subr.mxu0 0.0
      %v1246 = vand.u32 %v338, 4294901760
      %1247 = vmatpush1.msra.mxu0 %v1246
      %1248 = vmatprep.subr.mxu0 0.0
      %v1249 = vand.u32 %v339, 4294901760
      %1250 = vmatpush1.msra.mxu0 %v1249
      %1251 = vmatprep.subr.mxu0 0.0
      %v1252 = vand.u32 %v340, 4294901760
      %1253 = vmatpush1.msra.mxu0 %v1252
      %1254 = vmatprep.subr.mxu0 0.0
      %v1255 = vand.u32 %v341, 4294901760
      %1256 = vmatpush1.msra.mxu0 %v1255
      %1257 = vmatprep.subr.mxu0 0.0
      %v1258 = vand.u32 %v342, 4294901760
      %1259 = vmatpush1.msra.mxu0 %v1258
      %1260 = vmatprep.subr.mxu0 0.0
      %v1261 = vand.u32 %v343, 4294901760
      %1262 = vmatpush1.msra.mxu0 %v1261
      %1263 = vmatprep.subr.mxu0 0.0
      %v1264 = vand.u32 %v344, 4294901760
      %1265 = vmatpush1.msra.mxu0 %v1264
      %1266 = vmatprep.subr.mxu0 0.0
      %v1267 = vand.u32 %v345, 4294901760
      %1268 = vmatpush1.msra.mxu0 %v1267
      %1269 = vmatprep.subr.mxu0 0.0
      %v1270 = vand.u32 %v346, 4294901760
      %1271 = vmatpush1.msra.mxu0 %v1270
      %1272 = vmatprep.subr.mxu0 0.0
      %v1273 = vand.u32 %v347, 4294901760
      %1274 = vmatpush1.msra.mxu0 %v1273
      %1275 = vmatprep.subr.mxu0 0.0
      %v1276 = vand.u32 %v348, 4294901760
      %1277 = vmatpush1.msra.mxu0 %v1276
      %1278 = vmatprep.subr.mxu0 0.0
      %v1279 = vand.u32 %v349, 4294901760
      %1280 = vmatpush1.msra.mxu0 %v1279
      %1281 = vmatprep.subr.mxu0 0.0
      %v1282 = vand.u32 %v350, 4294901760
      %1283 = vmatpush1.msra.mxu0 %v1282
      %1284 = vmatprep.subr.mxu0 0.0
      %v1285 = vand.u32 %v351, 4294901760
      %1286 = vmatpush1.msra.mxu0 %v1285
      %v1287 = vand.u32 %v313, 4294901760
      %1288 = vmatprep.mubr.f32.mxu0 %v1287
      %v1289 = vand.u32 %v312, 4294901760
      %1290 = vmatmul.mubr.f32.gmra.mrb[0].mxu0 %v1289
      %v1291 = vpop.f32.mrb[0].mxu0
      %v1292 = vadd.f32 %v1181, %v1291
      %v1293 = vpop.f32.mrb[0].mxu0
      %v1294 = vand.u32 %v317, 4294901760
      %1295 = vmatprep.mubr.f32.mxu0 %v1294
      %v1296 = vand.u32 %v316, 4294901760
      %1297 = vmatmul.mubr.f32.gmra.mrb[0].mxu0 %v1296
      %v1298 = vpop.f32.mrb[0].mxu0
      %v1299 = vadd.f32 %v1188, %v1298
      %v1300 = vpop.f32.mrb[0].mxu0
      %1301 = vdwg.mxu0
      %1302 = vmatprep.subr.mxu0 0.0
      %v1303 = vand.u32 %v352, 4294901760
      %1304 = vmatpush1.msra.mxu0 %v1303
      %1305 = vmatprep.subr.mxu0 0.0
      %v1306 = vand.u32 %v353, 4294901760
      %1307 = vmatpush1.msra.mxu0 %v1306
      %1308 = vmatprep.subr.mxu0 0.0
      %v1309 = vand.u32 %v354, 4294901760
      %1310 = vmatpush1.msra.mxu0 %v1309
      %1311 = vmatprep.subr.mxu0 0.0
      %v1312 = vand.u32 %v355, 4294901760
      %1313 = vmatpush1.msra.mxu0 %v1312
      %1314 = vmatprep.subr.mxu0 0.0
      %v1315 = vand.u32 %v356, 4294901760
      %1316 = vmatpush1.msra.mxu0 %v1315
      %1317 = vmatprep.subr.mxu0 0.0
      %v1318 = vand.u32 %v357, 4294901760
      %1319 = vmatpush1.msra.mxu0 %v1318
      %1320 = vmatprep.subr.mxu0 0.0
      %v1321 = vand.u32 %v358, 4294901760
      %1322 = vmatpush1.msra.mxu0 %v1321
      %1323 = vmatprep.subr.mxu0 0.0
      %v1324 = vand.u32 %v359, 4294901760
      %1325 = vmatpush1.msra.mxu0 %v1324
      %1326 = vmatprep.subr.mxu0 0.0
      %v1327 = vand.u32 %v360, 4294901760
      %1328 = vmatpush1.msra.mxu0 %v1327
      %1329 = vmatprep.subr.mxu0 0.0
      %v1330 = vand.u32 %v361, 4294901760
      %1331 = vmatpush1.msra.mxu0 %v1330
      %1332 = vmatprep.subr.mxu0 0.0
      %v1333 = vand.u32 %v362, 4294901760
      %1334 = vmatpush1.msra.mxu0 %v1333
      %1335 = vmatprep.subr.mxu0 0.0
      %v1336 = vand.u32 %v363, 4294901760
      %1337 = vmatpush1.msra.mxu0 %v1336
      %1338 = vmatprep.subr.mxu0 0.0
      %v1339 = vand.u32 %v364, 4294901760
      %1340 = vmatpush1.msra.mxu0 %v1339
      %1341 = vmatprep.subr.mxu0 0.0
      %v1342 = vand.u32 %v365, 4294901760
      %1343 = vmatpush1.msra.mxu0 %v1342
      %1344 = vmatprep.subr.mxu0 0.0
      %v1345 = vand.u32 %v366, 4294901760
      %1346 = vmatpush1.msra.mxu0 %v1345
      %1347 = vmatprep.subr.mxu0 0.0
      %v1348 = vand.u32 %v367, 4294901760
      %1349 = vmatpush1.msra.mxu0 %v1348
      %1350 = vmatprep.subr.mxu0 0.0
      %v1351 = vand.u32 %v368, 4294901760
      %1352 = vmatpush1.msra.mxu0 %v1351
      %1353 = vmatprep.subr.mxu0 0.0
      %v1354 = vand.u32 %v369, 4294901760
      %1355 = vmatpush1.msra.mxu0 %v1354
      %1356 = vmatprep.subr.mxu0 0.0
      %v1357 = vand.u32 %v370, 4294901760
      %1358 = vmatpush1.msra.mxu0 %v1357
      %1359 = vmatprep.subr.mxu0 0.0
      %v1360 = vand.u32 %v371, 4294901760
      %1361 = vmatpush1.msra.mxu0 %v1360
      %1362 = vmatprep.subr.mxu0 0.0
      %v1363 = vand.u32 %v372, 4294901760
      %1364 = vmatpush1.msra.mxu0 %v1363
      %1365 = vmatprep.subr.mxu0 0.0
      %v1366 = vand.u32 %v373, 4294901760
      %1367 = vmatpush1.msra.mxu0 %v1366
      %1368 = vmatprep.subr.mxu0 0.0
      %v1369 = vand.u32 %v374, 4294901760
      %1370 = vmatpush1.msra.mxu0 %v1369
      %1371 = vmatprep.subr.mxu0 0.0
      %v1372 = vand.u32 %v375, 4294901760
      %1373 = vmatpush1.msra.mxu0 %v1372
      %1374 = vmatprep.subr.mxu0 0.0
      %v1375 = vand.u32 %v376, 4294901760
      %1376 = vmatpush1.msra.mxu0 %v1375
      %1377 = vmatprep.subr.mxu0 0.0
      %v1378 = vand.u32 %v377, 4294901760
      %1379 = vmatpush1.msra.mxu0 %v1378
      %1380 = vmatprep.subr.mxu0 0.0
      %v1381 = vand.u32 %v378, 4294901760
      %1382 = vmatpush1.msra.mxu0 %v1381
      %1383 = vmatprep.subr.mxu0 0.0
      %v1384 = vand.u32 %v379, 4294901760
      %1385 = vmatpush1.msra.mxu0 %v1384
      %1386 = vmatprep.subr.mxu0 0.0
      %v1387 = vand.u32 %v380, 4294901760
      %1388 = vmatpush1.msra.mxu0 %v1387
      %1389 = vmatprep.subr.mxu0 0.0
      %v1390 = vand.u32 %v381, 4294901760
      %1391 = vmatpush1.msra.mxu0 %v1390
      %1392 = vmatprep.subr.mxu0 0.0
      %v1393 = vand.u32 %v382, 4294901760
      %1394 = vmatpush1.msra.mxu0 %v1393
      %1395 = vmatprep.subr.mxu0 0.0
      %v1396 = vand.u32 %v383, 4294901760
      %1397 = vmatpush1.msra.mxu0 %v1396
      %v1398 = vand.u32 %v315, 4294901760
      %v1399 = vsub.f32 %v315, %v1398
      %v1400 = vand.u32 %v1399, 4294901760
      %v1401 = vsub.f32 %v1399, %v1400
      %v1402 = vand.u32 %v1401, 4294901760
      %1403 = vmatprep.mubr.f32.mxu0 %v1402
      %v1404 = vand.u32 %v314, 4294901760
      %v1405 = vsub.f32 %v314, %v1404
      %v1406 = vand.u32 %v1405, 4294901760
      %v1407 = vsub.f32 %v1405, %v1406
      %v1408 = vand.u32 %v1407, 4294901760
      %1409 = vmatmul.mubr.f32.gmra.mrb[0].mxu0 %v1408
      %v1410 = vpop.f32.mrb[0].mxu0
      %v1411 = vadd.f32 %v1292, %v1410
      %v1412 = vpop.f32.mrb[0].mxu0
      %v1413 = vand.u32 %v319, 4294901760
      %v1414 = vsub.f32 %v319, %v1413
      %v1415 = vand.u32 %v1414, 4294901760
      %v1416 = vsub.f32 %v1414, %v1415
      %v1417 = vand.u32 %v1416, 4294901760
      %1418 = vmatprep.mubr.f32.mxu0 %v1417
      %v1419 = vand.u32 %v318, 4294901760
      %v1420 = vsub.f32 %v318, %v1419
      %v1421 = vand.u32 %v1420, 4294901760
      %v1422 = vsub.f32 %v1420, %v1421
      %v1423 = vand.u32 %v1422, 4294901760
      %1424 = vmatmul.mubr.f32.gmra.mrb[0].mxu0 %v1423
      %v1425 = vpop.f32.mrb[0].mxu0
      %v1426 = vadd.f32 %v1299, %v1425
      %v1427 = vpop.f32.mrb[0].mxu0
      %1428 = vdwg.mxu0
      %1429 = vmatprep.subr.mxu0 0.0
      %v1430 = vand.u32 %v352, 4294901760
      %v1431 = vsub.f32 %v352, %v1430
      %v1432 = vand.u32 %v1431, 4294901760
      %v1433 = vsub.f32 %v1431, %v1432
      %v1434 = vand.u32 %v1433, 4294901760
      %1435 = vmatpush1.msra.mxu0 %v1434
      %1436 = vmatprep.subr.mxu0 0.0
      %v1437 = vand.u32 %v353, 4294901760
      %v1438 = vsub.f32 %v353, %v1437
      %v1439 = vand.u32 %v1438, 4294901760
      %v1440 = vsub.f32 %v1438, %v1439
      %v1441 = vand.u32 %v1440, 4294901760
      %1442 = vmatpush1.msra.mxu0 %v1441
      %1443 = vmatprep.subr.mxu0 0.0
      %v1444 = vand.u32 %v354, 4294901760
      %v1445 = vsub.f32 %v354, %v1444
      %v1446 = vand.u32 %v1445, 4294901760
      %v1447 = vsub.f32 %v1445, %v1446
      %v1448 = vand.u32 %v1447, 4294901760
      %1449 = vmatpush1.msra.mxu0 %v1448
      %1450 = vmatprep.subr.mxu0 0.0
      %v1451 = vand.u32 %v355, 4294901760
      %v1452 = vsub.f32 %v355, %v1451
      %v1453 = vand.u32 %v1452, 4294901760
      %v1454 = vsub.f32 %v1452, %v1453
      %v1455 = vand.u32 %v1454, 4294901760
      %1456 = vmatpush1.msra.mxu0 %v1455
      %1457 = vmatprep.subr.mxu0 0.0
      %v1458 = vand.u32 %v356, 4294901760
      %v1459 = vsub.f32 %v356, %v1458
      %v1460 = vand.u32 %v1459, 4294901760
      %v1461 = vsub.f32 %v1459, %v1460
      %v1462 = vand.u32 %v1461, 4294901760
      %1463 = vmatpush1.msra.mxu0 %v1462
      %1464 = vmatprep.subr.mxu0 0.0
      %v1465 = vand.u32 %v357, 4294901760
      %v1466 = vsub.f32 %v357, %v1465
      %v1467 = vand.u32 %v1466, 4294901760
      %v1468 = vsub.f32 %v1466, %v1467
      %v1469 = vand.u32 %v1468, 4294901760
      %1470 = vmatpush1.msra.mxu0 %v1469
      %1471 = vmatprep.subr.mxu0 0.0
      %v1472 = vand.u32 %v358, 4294901760
      %v1473 = vsub.f32 %v358, %v1472
      %v1474 = vand.u32 %v1473, 4294901760
      %v1475 = vsub.f32 %v1473, %v1474
      %v1476 = vand.u32 %v1475, 4294901760
      %1477 = vmatpush1.msra.mxu0 %v1476
      %1478 = vmatprep.subr.mxu0 0.0
      %v1479 = vand.u32 %v359, 4294901760
      %v1480 = vsub.f32 %v359, %v1479
      %v1481 = vand.u32 %v1480, 4294901760
      %v1482 = vsub.f32 %v1480, %v1481
      %v1483 = vand.u32 %v1482, 4294901760
      %1484 = vmatpush1.msra.mxu0 %v1483
      %1485 = vmatprep.subr.mxu0 0.0
      %v1486 = vand.u32 %v360, 4294901760
      %v1487 = vsub.f32 %v360, %v1486
      %v1488 = vand.u32 %v1487, 4294901760
      %v1489 = vsub.f32 %v1487, %v1488
      %v1490 = vand.u32 %v1489, 4294901760
      %1491 = vmatpush1.msra.mxu0 %v1490
      %1492 = vmatprep.subr.mxu0 0.0
      %v1493 = vand.u32 %v361, 4294901760
      %v1494 = vsub.f32 %v361, %v1493
      %v1495 = vand.u32 %v1494, 4294901760
      %v1496 = vsub.f32 %v1494, %v1495
      %v1497 = vand.u32 %v1496, 4294901760
      %1498 = vmatpush1.msra.mxu0 %v1497
      %1499 = vmatprep.subr.mxu0 0.0
      %v1500 = vand.u32 %v362, 4294901760
      %v1501 = vsub.f32 %v362, %v1500
      %v1502 = vand.u32 %v1501, 4294901760
      %v1503 = vsub.f32 %v1501, %v1502
      %v1504 = vand.u32 %v1503, 4294901760
      %1505 = vmatpush1.msra.mxu0 %v1504
      %1506 = vmatprep.subr.mxu0 0.0
      %v1507 = vand.u32 %v363, 4294901760
      %v1508 = vsub.f32 %v363, %v1507
      %v1509 = vand.u32 %v1508, 4294901760
      %v1510 = vsub.f32 %v1508, %v1509
      %v1511 = vand.u32 %v1510, 4294901760
      %1512 = vmatpush1.msra.mxu0 %v1511
      %1513 = vmatprep.subr.mxu0 0.0
      %v1514 = vand.u32 %v364, 4294901760
      %v1515 = vsub.f32 %v364, %v1514
      %v1516 = vand.u32 %v1515, 4294901760
      %v1517 = vsub.f32 %v1515, %v1516
      %v1518 = vand.u32 %v1517, 4294901760
      %1519 = vmatpush1.msra.mxu0 %v1518
      %1520 = vmatprep.subr.mxu0 0.0
      %v1521 = vand.u32 %v365, 4294901760
      %v1522 = vsub.f32 %v365, %v1521
      %v1523 = vand.u32 %v1522, 4294901760
      %v1524 = vsub.f32 %v1522, %v1523
      %v1525 = vand.u32 %v1524, 4294901760
      %1526 = vmatpush1.msra.mxu0 %v1525
      %1527 = vmatprep.subr.mxu0 0.0
      %v1528 = vand.u32 %v366, 4294901760
      %v1529 = vsub.f32 %v366, %v1528
      %v1530 = vand.u32 %v1529, 4294901760
      %v1531 = vsub.f32 %v1529, %v1530
      %v1532 = vand.u32 %v1531, 4294901760
      %1533 = vmatpush1.msra.mxu0 %v1532
      %1534 = vmatprep.subr.mxu0 0.0
      %v1535 = vand.u32 %v367, 4294901760
      %v1536 = vsub.f32 %v367, %v1535
      %v1537 = vand.u32 %v1536, 4294901760
      %v1538 = vsub.f32 %v1536, %v1537
      %v1539 = vand.u32 %v1538, 4294901760
      %1540 = vmatpush1.msra.mxu0 %v1539
      %1541 = vmatprep.subr.mxu0 0.0
      %v1542 = vand.u32 %v368, 4294901760
      %v1543 = vsub.f32 %v368, %v1542
      %v1544 = vand.u32 %v1543, 4294901760
      %v1545 = vsub.f32 %v1543, %v1544
      %v1546 = vand.u32 %v1545, 4294901760
      %1547 = vmatpush1.msra.mxu0 %v1546
      %1548 = vmatprep.subr.mxu0 0.0
      %v1549 = vand.u32 %v369, 4294901760
      %v1550 = vsub.f32 %v369, %v1549
      %v1551 = vand.u32 %v1550, 4294901760
      %v1552 = vsub.f32 %v1550, %v1551
      %v1553 = vand.u32 %v1552, 4294901760
      %1554 = vmatpush1.msra.mxu0 %v1553
      %1555 = vmatprep.subr.mxu0 0.0
      %v1556 = vand.u32 %v370, 4294901760
      %v1557 = vsub.f32 %v370, %v1556
      %v1558 = vand.u32 %v1557, 4294901760
      %v1559 = vsub.f32 %v1557, %v1558
      %v1560 = vand.u32 %v1559, 4294901760
      %1561 = vmatpush1.msra.mxu0 %v1560
      %1562 = vmatprep.subr.mxu0 0.0
      %v1563 = vand.u32 %v371, 4294901760
      %v1564 = vsub.f32 %v371, %v1563
      %v1565 = vand.u32 %v1564, 4294901760
      %v1566 = vsub.f32 %v1564, %v1565
      %v1567 = vand.u32 %v1566, 4294901760
      %1568 = vmatpush1.msra.mxu0 %v1567
      %1569 = vmatprep.subr.mxu0 0.0
      %v1570 = vand.u32 %v372, 4294901760
      %v1571 = vsub.f32 %v372, %v1570
      %v1572 = vand.u32 %v1571, 4294901760
      %v1573 = vsub.f32 %v1571, %v1572
      %v1574 = vand.u32 %v1573, 4294901760
      %1575 = vmatpush1.msra.mxu0 %v1574
      %1576 = vmatprep.subr.mxu0 0.0
      %v1577 = vand.u32 %v373, 4294901760
      %v1578 = vsub.f32 %v373, %v1577
      %v1579 = vand.u32 %v1578, 4294901760
      %v1580 = vsub.f32 %v1578, %v1579
      %v1581 = vand.u32 %v1580, 4294901760
      %1582 = vmatpush1.msra.mxu0 %v1581
      %1583 = vmatprep.subr.mxu0 0.0
      %v1584 = vand.u32 %v374, 4294901760
      %v1585 = vsub.f32 %v374, %v1584
      %v1586 = vand.u32 %v1585, 4294901760
      %v1587 = vsub.f32 %v1585, %v1586
      %v1588 = vand.u32 %v1587, 4294901760
      %1589 = vmatpush1.msra.mxu0 %v1588
      %1590 = vmatprep.subr.mxu0 0.0
      %v1591 = vand.u32 %v375, 4294901760
      %v1592 = vsub.f32 %v375, %v1591
      %v1593 = vand.u32 %v1592, 4294901760
      %v1594 = vsub.f32 %v1592, %v1593
      %v1595 = vand.u32 %v1594, 4294901760
      %1596 = vmatpush1.msra.mxu0 %v1595
      %1597 = vmatprep.subr.mxu0 0.0
      %v1598 = vand.u32 %v376, 4294901760
      %v1599 = vsub.f32 %v376, %v1598
      %v1600 = vand.u32 %v1599, 4294901760
      %v1601 = vsub.f32 %v1599, %v1600
      %v1602 = vand.u32 %v1601, 4294901760
      %1603 = vmatpush1.msra.mxu0 %v1602
      %1604 = vmatprep.subr.mxu0 0.0
      %v1605 = vand.u32 %v377, 4294901760
      %v1606 = vsub.f32 %v377, %v1605
      %v1607 = vand.u32 %v1606, 4294901760
      %v1608 = vsub.f32 %v1606, %v1607
      %v1609 = vand.u32 %v1608, 4294901760
      %1610 = vmatpush1.msra.mxu0 %v1609
      %1611 = vmatprep.subr.mxu0 0.0
      %v1612 = vand.u32 %v378, 4294901760
      %v1613 = vsub.f32 %v378, %v1612
      %v1614 = vand.u32 %v1613, 4294901760
      %v1615 = vsub.f32 %v1613, %v1614
      %v1616 = vand.u32 %v1615, 4294901760
      %1617 = vmatpush1.msra.mxu0 %v1616
      %1618 = vmatprep.subr.mxu0 0.0
      %v1619 = vand.u32 %v379, 4294901760
      %v1620 = vsub.f32 %v379, %v1619
      %v1621 = vand.u32 %v1620, 4294901760
      %v1622 = vsub.f32 %v1620, %v1621
      %v1623 = vand.u32 %v1622, 4294901760
      %1624 = vmatpush1.msra.mxu0 %v1623
      %1625 = vmatprep.subr.mxu0 0.0
      %v1626 = vand.u32 %v380, 4294901760
      %v1627 = vsub.f32 %v380, %v1626
      %v1628 = vand.u32 %v1627, 4294901760
      %v1629 = vsub.f32 %v1627, %v1628
      %v1630 = vand.u32 %v1629, 4294901760
      %1631 = vmatpush1.msra.mxu0 %v1630
      %1632 = vmatprep.subr.mxu0 0.0
      %v1633 = vand.u32 %v381, 4294901760
      %v1634 = vsub.f32 %v381, %v1633
      %v1635 = vand.u32 %v1634, 4294901760
      %v1636 = vsub.f32 %v1634, %v1635
      %v1637 = vand.u32 %v1636, 4294901760
      %1638 = vmatpush1.msra.mxu0 %v1637
      %1639 = vmatprep.subr.mxu0 0.0
      %v1640 = vand.u32 %v382, 4294901760
      %v1641 = vsub.f32 %v382, %v1640
      %v1642 = vand.u32 %v1641, 4294901760
      %v1643 = vsub.f32 %v1641, %v1642
      %v1644 = vand.u32 %v1643, 4294901760
      %1645 = vmatpush1.msra.mxu0 %v1644
      %1646 = vmatprep.subr.mxu0 0.0
      %v1647 = vand.u32 %v383, 4294901760
      %v1648 = vsub.f32 %v383, %v1647
      %v1649 = vand.u32 %v1648, 4294901760
      %v1650 = vsub.f32 %v1648, %v1649
      %v1651 = vand.u32 %v1650, 4294901760
      %1652 = vmatpush1.msra.mxu0 %v1651
      %v1653 = vand.u32 %v315, 4294901760
      %1654 = vmatprep.mubr.f32.mxu0 %v1653
      %v1655 = vand.u32 %v314, 4294901760
      %1656 = vmatmul.mubr.f32.gmra.mrb[0].mxu0 %v1655
      %v1657 = vpop.f32.mrb[0].mxu0
      %v1658 = vadd.f32 %v1411, %v1657
      %v1659 = vpop.f32.mrb[0].mxu0
      %v1660 = vand.u32 %v319, 4294901760
      %1661 = vmatprep.mubr.f32.mxu0 %v1660
      %v1662 = vand.u32 %v318, 4294901760
      %1663 = vmatmul.mubr.f32.gmra.mrb[0].mxu0 %v1662
      %v1664 = vpop.f32.mrb[0].mxu0
      %v1665 = vadd.f32 %v1426, %v1664
      %v1666 = vpop.f32.mrb[0].mxu0
      %1667 = vdwg.mxu0
      %1668 = vmatprep.subr.mxu0 0.0
      %v1669 = vand.u32 %v352, 4294901760
      %v1670 = vsub.f32 %v352, %v1669
      %1671 = vmatpush1.msra.mxu0 %v1670
      %1672 = vmatprep.subr.mxu0 0.0
      %v1673 = vand.u32 %v353, 4294901760
      %v1674 = vsub.f32 %v353, %v1673
      %1675 = vmatpush1.msra.mxu0 %v1674
      %1676 = vmatprep.subr.mxu0 0.0
      %v1677 = vand.u32 %v354, 4294901760
      %v1678 = vsub.f32 %v354, %v1677
      %1679 = vmatpush1.msra.mxu0 %v1678
      %1680 = vmatprep.subr.mxu0 0.0
      %v1681 = vand.u32 %v355, 4294901760
      %v1682 = vsub.f32 %v355, %v1681
      %1683 = vmatpush1.msra.mxu0 %v1682
      %1684 = vmatprep.subr.mxu0 0.0
      %v1685 = vand.u32 %v356, 4294901760
      %v1686 = vsub.f32 %v356, %v1685
      %1687 = vmatpush1.msra.mxu0 %v1686
      %1688 = vmatprep.subr.mxu0 0.0
      %v1689 = vand.u32 %v357, 4294901760
      %v1690 = vsub.f32 %v357, %v1689
      %1691 = vmatpush1.msra.mxu0 %v1690
      %1692 = vmatprep.subr.mxu0 0.0
      %v1693 = vand.u32 %v358, 4294901760
      %v1694 = vsub.f32 %v358, %v1693
      %1695 = vmatpush1.msra.mxu0 %v1694
      %1696 = vmatprep.subr.mxu0 0.0
      %v1697 = vand.u32 %v359, 4294901760
      %v1698 = vsub.f32 %v359, %v1697
      %1699 = vmatpush1.msra.mxu0 %v1698
      %1700 = vmatprep.subr.mxu0 0.0
      %v1701 = vand.u32 %v360, 4294901760
      %v1702 = vsub.f32 %v360, %v1701
      %1703 = vmatpush1.msra.mxu0 %v1702
      %1704 = vmatprep.subr.mxu0 0.0
      %v1705 = vand.u32 %v361, 4294901760
      %v1706 = vsub.f32 %v361, %v1705
      %1707 = vmatpush1.msra.mxu0 %v1706
      %1708 = vmatprep.subr.mxu0 0.0
      %v1709 = vand.u32 %v362, 4294901760
      %v1710 = vsub.f32 %v362, %v1709
      %1711 = vmatpush1.msra.mxu0 %v1710
      %1712 = vmatprep.subr.mxu0 0.0
      %v1713 = vand.u32 %v363, 4294901760
      %v1714 = vsub.f32 %v363, %v1713
      %1715 = vmatpush1.msra.mxu0 %v1714
      %1716 = vmatprep.subr.mxu0 0.0
      %v1717 = vand.u32 %v364, 4294901760
      %v1718 = vsub.f32 %v364, %v1717
      %1719 = vmatpush1.msra.mxu0 %v1718
      %1720 = vmatprep.subr.mxu0 0.0
      %v1721 = vand.u32 %v365, 4294901760
      %v1722 = vsub.f32 %v365, %v1721
      %1723 = vmatpush1.msra.mxu0 %v1722
      %1724 = vmatprep.subr.mxu0 0.0
      %v1725 = vand.u32 %v366, 4294901760
      %v1726 = vsub.f32 %v366, %v1725
      %1727 = vmatpush1.msra.mxu0 %v1726
      %1728 = vmatprep.subr.mxu0 0.0
      %v1729 = vand.u32 %v367, 4294901760
      %v1730 = vsub.f32 %v367, %v1729
      %1731 = vmatpush1.msra.mxu0 %v1730
      %1732 = vmatprep.subr.mxu0 0.0
      %v1733 = vand.u32 %v368, 4294901760
      %v1734 = vsub.f32 %v368, %v1733
      %1735 = vmatpush1.msra.mxu0 %v1734
      %1736 = vmatprep.subr.mxu0 0.0
      %v1737 = vand.u32 %v369, 4294901760
      %v1738 = vsub.f32 %v369, %v1737
      %1739 = vmatpush1.msra.mxu0 %v1738
      %1740 = vmatprep.subr.mxu0 0.0
      %v1741 = vand.u32 %v370, 4294901760
      %v1742 = vsub.f32 %v370, %v1741
      %1743 = vmatpush1.msra.mxu0 %v1742
      %1744 = vmatprep.subr.mxu0 0.0
      %v1745 = vand.u32 %v371, 4294901760
      %v1746 = vsub.f32 %v371, %v1745
      %1747 = vmatpush1.msra.mxu0 %v1746
      %1748 = vmatprep.subr.mxu0 0.0
      %v1749 = vand.u32 %v372, 4294901760
      %v1750 = vsub.f32 %v372, %v1749
      %1751 = vmatpush1.msra.mxu0 %v1750
      %1752 = vmatprep.subr.mxu0 0.0
      %v1753 = vand.u32 %v373, 4294901760
      %v1754 = vsub.f32 %v373, %v1753
      %1755 = vmatpush1.msra.mxu0 %v1754
      %1756 = vmatprep.subr.mxu0 0.0
      %v1757 = vand.u32 %v374, 4294901760
      %v1758 = vsub.f32 %v374, %v1757
      %1759 = vmatpush1.msra.mxu0 %v1758
      %1760 = vmatprep.subr.mxu0 0.0
      %v1761 = vand.u32 %v375, 4294901760
      %v1762 = vsub.f32 %v375, %v1761
      %1763 = vmatpush1.msra.mxu0 %v1762
      %1764 = vmatprep.subr.mxu0 0.0
      %v1765 = vand.u32 %v376, 4294901760
      %v1766 = vsub.f32 %v376, %v1765
      %1767 = vmatpush1.msra.mxu0 %v1766
      %1768 = vmatprep.subr.mxu0 0.0
      %v1769 = vand.u32 %v377, 4294901760
      %v1770 = vsub.f32 %v377, %v1769
      %1771 = vmatpush1.msra.mxu0 %v1770
      %1772 = vmatprep.subr.mxu0 0.0
      %v1773 = vand.u32 %v378, 4294901760
      %v1774 = vsub.f32 %v378, %v1773
      %1775 = vmatpush1.msra.mxu0 %v1774
      %1776 = vmatprep.subr.mxu0 0.0
      %v1777 = vand.u32 %v379, 4294901760
      %v1778 = vsub.f32 %v379, %v1777
      %1779 = vmatpush1.msra.mxu0 %v1778
      %1780 = vmatprep.subr.mxu0 0.0
      %v1781 = vand.u32 %v380, 4294901760
      %v1782 = vsub.f32 %v380, %v1781
      %1783 = vmatpush1.msra.mxu0 %v1782
      %1784 = vmatprep.subr.mxu0 0.0
      %v1785 = vand.u32 %v381, 4294901760
      %v1786 = vsub.f32 %v381, %v1785
      %1787 = vmatpush1.msra.mxu0 %v1786
      %1788 = vmatprep.subr.mxu0 0.0
      %v1789 = vand.u32 %v382, 4294901760
      %v1790 = vsub.f32 %v382, %v1789
      %1791 = vmatpush1.msra.mxu0 %v1790
      %1792 = vmatprep.subr.mxu0 0.0
      %v1793 = vand.u32 %v383, 4294901760
      %v1794 = vsub.f32 %v383, %v1793
      %1795 = vmatpush1.msra.mxu0 %v1794
      %v1796 = vand.u32 %v315, 4294901760
      %v1797 = vsub.f32 %v315, %v1796
      %1798 = vmatprep.mubr.f32.mxu0 %v1797
      %v1799 = vand.u32 %v314, 4294901760
      %v1800 = vsub.f32 %v314, %v1799
      %1801 = vmatmul.mubr.f32.gmra.mrb[0].mxu0 %v1800
      %v1802 = vpop.f32.mrb[0].mxu0
      %v1803 = vadd.f32 %v1658, %v1802
      %v1804 = vpop.f32.mrb[0].mxu0
      %v1805 = vand.u32 %v319, 4294901760
      %v1806 = vsub.f32 %v319, %v1805
      %1807 = vmatprep.mubr.f32.mxu0 %v1806
      %v1808 = vand.u32 %v318, 4294901760
      %v1809 = vsub.f32 %v318, %v1808
      %1810 = vmatmul.mubr.f32.gmra.mrb[0].mxu0 %v1809
      %v1811 = vpop.f32.mrb[0].mxu0
      %v1812 = vadd.f32 %v1665, %v1811
      %v1813 = vpop.f32.mrb[0].mxu0
      %1814 = vdwg.mxu0
      %1815 = vmatprep.subr.mxu0 0.0
      %v1816 = vand.u32 %v352, 4294901760
      %1817 = vmatpush1.msra.mxu0 %v1816
      %1818 = vmatprep.subr.mxu0 0.0
      %v1819 = vand.u32 %v353, 4294901760
      %1820 = vmatpush1.msra.mxu0 %v1819
      %1821 = vmatprep.subr.mxu0 0.0
      %v1822 = vand.u32 %v354, 4294901760
      %1823 = vmatpush1.msra.mxu0 %v1822
      %1824 = vmatprep.subr.mxu0 0.0
      %v1825 = vand.u32 %v355, 4294901760
      %1826 = vmatpush1.msra.mxu0 %v1825
      %1827 = vmatprep.subr.mxu0 0.0
      %v1828 = vand.u32 %v356, 4294901760
      %1829 = vmatpush1.msra.mxu0 %v1828
      %1830 = vmatprep.subr.mxu0 0.0
      %v1831 = vand.u32 %v357, 4294901760
      %1832 = vmatpush1.msra.mxu0 %v1831
      %1833 = vmatprep.subr.mxu0 0.0
      %v1834 = vand.u32 %v358, 4294901760
      %1835 = vmatpush1.msra.mxu0 %v1834
      %1836 = vmatprep.subr.mxu0 0.0
      %v1837 = vand.u32 %v359, 4294901760
      %1838 = vmatpush1.msra.mxu0 %v1837
      %1839 = vmatprep.subr.mxu0 0.0
      %v1840 = vand.u32 %v360, 4294901760
      %1841 = vmatpush1.msra.mxu0 %v1840
      %1842 = vmatprep.subr.mxu0 0.0
      %v1843 = vand.u32 %v361, 4294901760
      %1844 = vmatpush1.msra.mxu0 %v1843
      %1845 = vmatprep.subr.mxu0 0.0
      %v1846 = vand.u32 %v362, 4294901760
      %1847 = vmatpush1.msra.mxu0 %v1846
      %1848 = vmatprep.subr.mxu0 0.0
      %v1849 = vand.u32 %v363, 4294901760
      %1850 = vmatpush1.msra.mxu0 %v1849
      %1851 = vmatprep.subr.mxu0 0.0
      %v1852 = vand.u32 %v364, 4294901760
      %1853 = vmatpush1.msra.mxu0 %v1852
      %1854 = vmatprep.subr.mxu0 0.0
      %v1855 = vand.u32 %v365, 4294901760
      %1856 = vmatpush1.msra.mxu0 %v1855
      %1857 = vmatprep.subr.mxu0 0.0
      %v1858 = vand.u32 %v366, 4294901760
      %1859 = vmatpush1.msra.mxu0 %v1858
      %1860 = vmatprep.subr.mxu0 0.0
      %v1861 = vand.u32 %v367, 4294901760
      %1862 = vmatpush1.msra.mxu0 %v1861
      %1863 = vmatprep.subr.mxu0 0.0
      %v1864 = vand.u32 %v368, 4294901760
      %1865 = vmatpush1.msra.mxu0 %v1864
      %1866 = vmatprep.subr.mxu0 0.0
      %v1867 = vand.u32 %v369, 4294901760
      %1868 = vmatpush1.msra.mxu0 %v1867
      %1869 = vmatprep.subr.mxu0 0.0
      %v1870 = vand.u32 %v370, 4294901760
      %1871 = vmatpush1.msra.mxu0 %v1870
      %1872 = vmatprep.subr.mxu0 0.0
      %v1873 = vand.u32 %v371, 4294901760
      %1874 = vmatpush1.msra.mxu0 %v1873
      %1875 = vmatprep.subr.mxu0 0.0
      %v1876 = vand.u32 %v372, 4294901760
      %1877 = vmatpush1.msra.mxu0 %v1876
      %1878 = vmatprep.subr.mxu0 0.0
      %v1879 = vand.u32 %v373, 4294901760
      %1880 = vmatpush1.msra.mxu0 %v1879
      %1881 = vmatprep.subr.mxu0 0.0
      %v1882 = vand.u32 %v374, 4294901760
      %1883 = vmatpush1.msra.mxu0 %v1882
      %1884 = vmatprep.subr.mxu0 0.0
      %v1885 = vand.u32 %v375, 4294901760
      %1886 = vmatpush1.msra.mxu0 %v1885
      %1887 = vmatprep.subr.mxu0 0.0
      %v1888 = vand.u32 %v376, 4294901760
      %1889 = vmatpush1.msra.mxu0 %v1888
      %1890 = vmatprep.subr.mxu0 0.0
      %v1891 = vand.u32 %v377, 4294901760
      %1892 = vmatpush1.msra.mxu0 %v1891
      %1893 = vmatprep.subr.mxu0 0.0
      %v1894 = vand.u32 %v378, 4294901760
      %1895 = vmatpush1.msra.mxu0 %v1894
      %1896 = vmatprep.subr.mxu0 0.0
      %v1897 = vand.u32 %v379, 4294901760
      %1898 = vmatpush1.msra.mxu0 %v1897
      %1899 = vmatprep.subr.mxu0 0.0
      %v1900 = vand.u32 %v380, 4294901760
      %1901 = vmatpush1.msra.mxu0 %v1900
      %1902 = vmatprep.subr.mxu0 0.0
      %v1903 = vand.u32 %v381, 4294901760
      %1904 = vmatpush1.msra.mxu0 %v1903
      %1905 = vmatprep.subr.mxu0 0.0
      %v1906 = vand.u32 %v382, 4294901760
      %1907 = vmatpush1.msra.mxu0 %v1906
      %1908 = vmatprep.subr.mxu0 0.0
      %v1909 = vand.u32 %v383, 4294901760
      %1910 = vmatpush1.msra.mxu0 %v1909
      %v1911 = vand.u32 %v315, 4294901760
      %v1912 = vsub.f32 %v315, %v1911
      %v1913 = vand.u32 %v1912, 4294901760
      %1914 = vmatprep.mubr.f32.mxu0 %v1913
      %v1915 = vand.u32 %v314, 4294901760
      %v1916 = vsub.f32 %v314, %v1915
      %v1917 = vand.u32 %v1916, 4294901760
      %1918 = vmatmul.mubr.f32.gmra.mrb[0].mxu0 %v1917
      %v1919 = vpop.f32.mrb[0].mxu0
      %v1920 = vadd.f32 %v1803, %v1919
      %v1921 = vpop.f32.mrb[0].mxu0
      %v1922 = vand.u32 %v319, 4294901760
      %v1923 = vsub.f32 %v319, %v1922
      %v1924 = vand.u32 %v1923, 4294901760
      %1925 = vmatprep.mubr.f32.mxu0 %v1924
      %v1926 = vand.u32 %v318, 4294901760
      %v1927 = vsub.f32 %v318, %v1926
      %v1928 = vand.u32 %v1927, 4294901760
      %1929 = vmatmul.mubr.f32.gmra.mrb[0].mxu0 %v1928
      %v1930 = vpop.f32.mrb[0].mxu0
      %v1931 = vadd.f32 %v1812, %v1930
      %v1932 = vpop.f32.mrb[0].mxu0
      %1933 = vdwg.mxu0
      %1934 = vmatprep.subr.mxu0 0.0
      %v1935 = vand.u32 %v352, 4294901760
      %v1936 = vsub.f32 %v352, %v1935
      %v1937 = vand.u32 %v1936, 4294901760
      %1938 = vmatpush1.msra.mxu0 %v1937
      %1939 = vmatprep.subr.mxu0 0.0
      %v1940 = vand.u32 %v353, 4294901760
      %v1941 = vsub.f32 %v353, %v1940
      %v1942 = vand.u32 %v1941, 4294901760
      %1943 = vmatpush1.msra.mxu0 %v1942
      %1944 = vmatprep.subr.mxu0 0.0
      %v1945 = vand.u32 %v354, 4294901760
      %v1946 = vsub.f32 %v354, %v1945
      %v1947 = vand.u32 %v1946, 4294901760
      %1948 = vmatpush1.msra.mxu0 %v1947
      %1949 = vmatprep.subr.mxu0 0.0
      %v1950 = vand.u32 %v355, 4294901760
      %v1951 = vsub.f32 %v355, %v1950
      %v1952 = vand.u32 %v1951, 4294901760
      %1953 = vmatpush1.msra.mxu0 %v1952
      %1954 = vmatprep.subr.mxu0 0.0
      %v1955 = vand.u32 %v356, 4294901760
      %v1956 = vsub.f32 %v356, %v1955
      %v1957 = vand.u32 %v1956, 4294901760
      %1958 = vmatpush1.msra.mxu0 %v1957
      %1959 = vmatprep.subr.mxu0 0.0
      %v1960 = vand.u32 %v357, 4294901760
      %v1961 = vsub.f32 %v357, %v1960
      %v1962 = vand.u32 %v1961, 4294901760
      %1963 = vmatpush1.msra.mxu0 %v1962
      %1964 = vmatprep.subr.mxu0 0.0
      %v1965 = vand.u32 %v358, 4294901760
      %v1966 = vsub.f32 %v358, %v1965
      %v1967 = vand.u32 %v1966, 4294901760
      %1968 = vmatpush1.msra.mxu0 %v1967
      %1969 = vmatprep.subr.mxu0 0.0
      %v1970 = vand.u32 %v359, 4294901760
      %v1971 = vsub.f32 %v359, %v1970
      %v1972 = vand.u32 %v1971, 4294901760
      %1973 = vmatpush1.msra.mxu0 %v1972
      %1974 = vmatprep.subr.mxu0 0.0
      %v1975 = vand.u32 %v360, 4294901760
      %v1976 = vsub.f32 %v360, %v1975
      %v1977 = vand.u32 %v1976, 4294901760
      %1978 = vmatpush1.msra.mxu0 %v1977
      %1979 = vmatprep.subr.mxu0 0.0
      %v1980 = vand.u32 %v361, 4294901760
      %v1981 = vsub.f32 %v361, %v1980
      %v1982 = vand.u32 %v1981, 4294901760
      %1983 = vmatpush1.msra.mxu0 %v1982
      %1984 = vmatprep.subr.mxu0 0.0
      %v1985 = vand.u32 %v362, 4294901760
      %v1986 = vsub.f32 %v362, %v1985
      %v1987 = vand.u32 %v1986, 4294901760
      %1988 = vmatpush1.msra.mxu0 %v1987
      %1989 = vmatprep.subr.mxu0 0.0
      %v1990 = vand.u32 %v363, 4294901760
      %v1991 = vsub.f32 %v363, %v1990
      %v1992 = vand.u32 %v1991, 4294901760
      %1993 = vmatpush1.msra.mxu0 %v1992
      %1994 = vmatprep.subr.mxu0 0.0
      %v1995 = vand.u32 %v364, 4294901760
      %v1996 = vsub.f32 %v364, %v1995
      %v1997 = vand.u32 %v1996, 4294901760
      %1998 = vmatpush1.msra.mxu0 %v1997
      %1999 = vmatprep.subr.mxu0 0.0
      %v2000 = vand.u32 %v365, 4294901760
      %v2001 = vsub.f32 %v365, %v2000
      %v2002 = vand.u32 %v2001, 4294901760
      %2003 = vmatpush1.msra.mxu0 %v2002
      %2004 = vmatprep.subr.mxu0 0.0
      %v2005 = vand.u32 %v366, 4294901760
      %v2006 = vsub.f32 %v366, %v2005
      %v2007 = vand.u32 %v2006, 4294901760
      %2008 = vmatpush1.msra.mxu0 %v2007
      %2009 = vmatprep.subr.mxu0 0.0
      %v2010 = vand.u32 %v367, 4294901760
      %v2011 = vsub.f32 %v367, %v2010
      %v2012 = vand.u32 %v2011, 4294901760
      %2013 = vmatpush1.msra.mxu0 %v2012
      %2014 = vmatprep.subr.mxu0 0.0
      %v2015 = vand.u32 %v368, 4294901760
      %v2016 = vsub.f32 %v368, %v2015
      %v2017 = vand.u32 %v2016, 4294901760
      %2018 = vmatpush1.msra.mxu0 %v2017
      %2019 = vmatprep.subr.mxu0 0.0
      %v2020 = vand.u32 %v369, 4294901760
      %v2021 = vsub.f32 %v369, %v2020
      %v2022 = vand.u32 %v2021, 4294901760
      %2023 = vmatpush1.msra.mxu0 %v2022
      %2024 = vmatprep.subr.mxu0 0.0
      %v2025 = vand.u32 %v370, 4294901760
      %v2026 = vsub.f32 %v370, %v2025
      %v2027 = vand.u32 %v2026, 4294901760
      %2028 = vmatpush1.msra.mxu0 %v2027
      %2029 = vmatprep.subr.mxu0 0.0
      %v2030 = vand.u32 %v371, 4294901760
      %v2031 = vsub.f32 %v371, %v2030
      %v2032 = vand.u32 %v2031, 4294901760
      %2033 = vmatpush1.msra.mxu0 %v2032
      %2034 = vmatprep.subr.mxu0 0.0
      %v2035 = vand.u32 %v372, 4294901760
      %v2036 = vsub.f32 %v372, %v2035
      %v2037 = vand.u32 %v2036, 4294901760
      %2038 = vmatpush1.msra.mxu0 %v2037
      %2039 = vmatprep.subr.mxu0 0.0
      %v2040 = vand.u32 %v373, 4294901760
      %v2041 = vsub.f32 %v373, %v2040
      %v2042 = vand.u32 %v2041, 4294901760
      %2043 = vmatpush1.msra.mxu0 %v2042
      %2044 = vmatprep.subr.mxu0 0.0
      %v2045 = vand.u32 %v374, 4294901760
      %v2046 = vsub.f32 %v374, %v2045
      %v2047 = vand.u32 %v2046, 4294901760
      %2048 = vmatpush1.msra.mxu0 %v2047
      %2049 = vmatprep.subr.mxu0 0.0
      %v2050 = vand.u32 %v375, 4294901760
      %v2051 = vsub.f32 %v375, %v2050
      %v2052 = vand.u32 %v2051, 4294901760
      %2053 = vmatpush1.msra.mxu0 %v2052
      %2054 = vmatprep.subr.mxu0 0.0
      %v2055 = vand.u32 %v376, 4294901760
      %v2056 = vsub.f32 %v376, %v2055
      %v2057 = vand.u32 %v2056, 4294901760
      %2058 = vmatpush1.msra.mxu0 %v2057
      %2059 = vmatprep.subr.mxu0 0.0
      %v2060 = vand.u32 %v377, 4294901760
      %v2061 = vsub.f32 %v377, %v2060
      %v2062 = vand.u32 %v2061, 4294901760
      %2063 = vmatpush1.msra.mxu0 %v2062
      %2064 = vmatprep.subr.mxu0 0.0
      %v2065 = vand.u32 %v378, 4294901760
      %v2066 = vsub.f32 %v378, %v2065
      %v2067 = vand.u32 %v2066, 4294901760
      %2068 = vmatpush1.msra.mxu0 %v2067
      %2069 = vmatprep.subr.mxu0 0.0
      %v2070 = vand.u32 %v379, 4294901760
      %v2071 = vsub.f32 %v379, %v2070
      %v2072 = vand.u32 %v2071, 4294901760
      %2073 = vmatpush1.msra.mxu0 %v2072
      %2074 = vmatprep.subr.mxu0 0.0
      %v2075 = vand.u32 %v380, 4294901760
      %v2076 = vsub.f32 %v380, %v2075
      %v2077 = vand.u32 %v2076, 4294901760
      %2078 = vmatpush1.msra.mxu0 %v2077
      %2079 = vmatprep.subr.mxu0 0.0
      %v2080 = vand.u32 %v381, 4294901760
      %v2081 = vsub.f32 %v381, %v2080
      %v2082 = vand.u32 %v2081, 4294901760
      %2083 = vmatpush1.msra.mxu0 %v2082
      %2084 = vmatprep.subr.mxu0 0.0
      %v2085 = vand.u32 %v382, 4294901760
      %v2086 = vsub.f32 %v382, %v2085
      %v2087 = vand.u32 %v2086, 4294901760
      %2088 = vmatpush1.msra.mxu0 %v2087
      %2089 = vmatprep.subr.mxu0 0.0
      %v2090 = vand.u32 %v383, 4294901760
      %v2091 = vsub.f32 %v383, %v2090
      %v2092 = vand.u32 %v2091, 4294901760
      %2093 = vmatpush1.msra.mxu0 %v2092
      %v2094 = vand.u32 %v315, 4294901760
      %2095 = vmatprep.mubr.f32.mxu0 %v2094
      %v2096 = vand.u32 %v314, 4294901760
      %2097 = vmatmul.mubr.f32.gmra.mrb[0].mxu0 %v2096
      %v2098 = vpop.f32.mrb[0].mxu0
      %v2099 = vadd.f32 %v1920, %v2098
      %v2100 = vpop.f32.mrb[0].mxu0
      %v2101 = vand.u32 %v319, 4294901760
      %2102 = vmatprep.mubr.f32.mxu0 %v2101
      %v2103 = vand.u32 %v318, 4294901760
      %2104 = vmatmul.mubr.f32.gmra.mrb[0].mxu0 %v2103
      %v2105 = vpop.f32.mrb[0].mxu0
      %v2106 = vadd.f32 %v1931, %v2105
      %v2107 = vpop.f32.mrb[0].mxu0
      %2108 = vdwg.mxu0
      %2109 = vmatprep.subr.mxu0 0.0
      %v2110 = vand.u32 %v352, 4294901760
      %2111 = vmatpush1.msra.mxu0 %v2110
      %2112 = vmatprep.subr.mxu0 0.0
      %v2113 = vand.u32 %v353, 4294901760
      %2114 = vmatpush1.msra.mxu0 %v2113
      %2115 = vmatprep.subr.mxu0 0.0
      %v2116 = vand.u32 %v354, 4294901760
      %2117 = vmatpush1.msra.mxu0 %v2116
      %2118 = vmatprep.subr.mxu0 0.0
      %v2119 = vand.u32 %v355, 4294901760
      %2120 = vmatpush1.msra.mxu0 %v2119
      %2121 = vmatprep.subr.mxu0 0.0
      %v2122 = vand.u32 %v356, 4294901760
      %2123 = vmatpush1.msra.mxu0 %v2122
      %2124 = vmatprep.subr.mxu0 0.0
      %v2125 = vand.u32 %v357, 4294901760
      %2126 = vmatpush1.msra.mxu0 %v2125
      %2127 = vmatprep.subr.mxu0 0.0
      %v2128 = vand.u32 %v358, 4294901760
      %2129 = vmatpush1.msra.mxu0 %v2128
      %2130 = vmatprep.subr.mxu0 0.0
      %v2131 = vand.u32 %v359, 4294901760
      %2132 = vmatpush1.msra.mxu0 %v2131
      %2133 = vmatprep.subr.mxu0 0.0
      %v2134 = vand.u32 %v360, 4294901760
      %2135 = vmatpush1.msra.mxu0 %v2134
      %2136 = vmatprep.subr.mxu0 0.0
      %v2137 = vand.u32 %v361, 4294901760
      %2138 = vmatpush1.msra.mxu0 %v2137
      %2139 = vmatprep.subr.mxu0 0.0
      %v2140 = vand.u32 %v362, 4294901760
      %2141 = vmatpush1.msra.mxu0 %v2140
      %2142 = vmatprep.subr.mxu0 0.0
      %v2143 = vand.u32 %v363, 4294901760
      %2144 = vmatpush1.msra.mxu0 %v2143
      %2145 = vmatprep.subr.mxu0 0.0
      %v2146 = vand.u32 %v364, 4294901760
      %2147 = vmatpush1.msra.mxu0 %v2146
      %2148 = vmatprep.subr.mxu0 0.0
      %v2149 = vand.u32 %v365, 4294901760
      %2150 = vmatpush1.msra.mxu0 %v2149
      %2151 = vmatprep.subr.mxu0 0.0
      %v2152 = vand.u32 %v366, 4294901760
      %2153 = vmatpush1.msra.mxu0 %v2152
      %2154 = vmatprep.subr.mxu0 0.0
      %v2155 = vand.u32 %v367, 4294901760
      %2156 = vmatpush1.msra.mxu0 %v2155
      %2157 = vmatprep.subr.mxu0 0.0
      %v2158 = vand.u32 %v368, 4294901760
      %2159 = vmatpush1.msra.mxu0 %v2158
      %2160 = vmatprep.subr.mxu0 0.0
      %v2161 = vand.u32 %v369, 4294901760
      %2162 = vmatpush1.msra.mxu0 %v2161
      %2163 = vmatprep.subr.mxu0 0.0
      %v2164 = vand.u32 %v370, 4294901760
      %2165 = vmatpush1.msra.mxu0 %v2164
      %2166 = vmatprep.subr.mxu0 0.0
      %v2167 = vand.u32 %v371, 4294901760
      %2168 = vmatpush1.msra.mxu0 %v2167
      %2169 = vmatprep.subr.mxu0 0.0
      %v2170 = vand.u32 %v372, 4294901760
      %2171 = vmatpush1.msra.mxu0 %v2170
      %2172 = vmatprep.subr.mxu0 0.0
      %v2173 = vand.u32 %v373, 4294901760
      %2174 = vmatpush1.msra.mxu0 %v2173
      %2175 = vmatprep.subr.mxu0 0.0
      %v2176 = vand.u32 %v374, 4294901760
      %2177 = vmatpush1.msra.mxu0 %v2176
      %2178 = vmatprep.subr.mxu0 0.0
      %v2179 = vand.u32 %v375, 4294901760
      %2180 = vmatpush1.msra.mxu0 %v2179
      %2181 = vmatprep.subr.mxu0 0.0
      %v2182 = vand.u32 %v376, 4294901760
      %2183 = vmatpush1.msra.mxu0 %v2182
      %2184 = vmatprep.subr.mxu0 0.0
      %v2185 = vand.u32 %v377, 4294901760
      %2186 = vmatpush1.msra.mxu0 %v2185
      %2187 = vmatprep.subr.mxu0 0.0
      %v2188 = vand.u32 %v378, 4294901760
      %2189 = vmatpush1.msra.mxu0 %v2188
      %2190 = vmatprep.subr.mxu0 0.0
      %v2191 = vand.u32 %v379, 4294901760
      %2192 = vmatpush1.msra.mxu0 %v2191
      %2193 = vmatprep.subr.mxu0 0.0
      %v2194 = vand.u32 %v380, 4294901760
      %2195 = vmatpush1.msra.mxu0 %v2194
      %2196 = vmatprep.subr.mxu0 0.0
      %v2197 = vand.u32 %v381, 4294901760
      %2198 = vmatpush1.msra.mxu0 %v2197
      %2199 = vmatprep.subr.mxu0 0.0
      %v2200 = vand.u32 %v382, 4294901760
      %2201 = vmatpush1.msra.mxu0 %v2200
      %2202 = vmatprep.subr.mxu0 0.0
      %v2203 = vand.u32 %v383, 4294901760
      %2204 = vmatpush1.msra.mxu0 %v2203
      %v2205 = vand.u32 %v315, 4294901760
      %2206 = vmatprep.mubr.f32.mxu0 %v2205
      %v2207 = vand.u32 %v314, 4294901760
      %2208 = vmatmul.mubr.f32.gmra.mrb[0].mxu0 %v2207
      %v2209 = vpop.f32.mrb[0].mxu0
      %v2210 = vadd.f32 %v2099, %v2209
      %v2211 = vpop.f32.mrb[0].mxu0
      %v2212 = vand.u32 %v319, 4294901760
      %2213 = vmatprep.mubr.f32.mxu0 %v2212
      %v2214 = vand.u32 %v318, 4294901760
      %2215 = vmatmul.mubr.f32.gmra.mrb[0].mxu0 %v2214
      %v2216 = vpop.f32.mrb[0].mxu0
      %v2217 = vadd.f32 %v2106, %v2216
      %v2218 = vpop.f32.mrb[0].mxu0
      %2219 = vdwg.mxu0
      %v2220 = vlaneseq
      %v2221 = vshrl.u32 %v2220, 7
      %v2222 = vadd.s32 %v2221, 8
      %s2223 = smul.u32 %s20, 16
      %v2224 = vstv %s2223
      %v2225 = vadd.s32 %v2221, %v2224
      %v2226 = vadd.s32 %v2222, %v2224
      %vm2227 = vcmp.lt.s32.totalorder %v2225, 10
      %vm2228 = vcmp.lt.s32.totalorder %v2226, 10
      %v2229 = vsel %vm2227, %v2210, 0.0
      %v2230 = vsel %vm2228, %v2217, 0.0
      %v2231 = vld [vmem:[%s290] sm:$0xff]
      %v2232 = vld [vmem:[%s290 + $0x8] sm:$0xff]
      %v2233 = vadd.f32 %v2231, 1e-08
      %v2234 = vadd.f32 %v2232, 1e-08
      %v2235 = vlog2.pop %v2233
      %v2236 = vmul.f32 %v2235, 0.6931472
      %v2237 = vlog2.pop %v2234
      %v2238 = vmul.f32 %v2237, 0.6931472
      %v2239 = vsub.f32 0.0, %v2236
      %v2240 = vsub.f32 0.0, %v2238
      %v2241 = vadd.f32 %v2239, 1e-08
      %v2242 = vadd.f32 %v2240, 1e-08
      %v2243 = vlog2.pop %v2241
      %v2244 = vmul.f32 %v2243, 0.6931472
      %v2245 = vlog2.pop %v2242
      %v2246 = vmul.f32 %v2245, 0.6931472
      %v2247 = vsub.f32 0.0, %v2244
      %v2248 = vsub.f32 0.0, %v2246
      %v2249 = vadd.f32 %v2229, %v2247
      %v2250 = vadd.f32 %v2230, %v2248
      %v2251 = vmul.f32 %v2249, 100.0
      %v2252 = vmul.f32 %v2250, 100.0
      %v2253 = vrot.slane %v2251, 1
      %v2254 = vrot.slane %v2252, 1
      %vm2255 = vcmp.lt.s32.totalorder %v2221, 7
      %v2256 = vsel %vm2255, %v2253, %v2254
      %v2257 = vsel %vm2255, %v2254, %v2253
      %v2258 = vrot.slane %v2251, 7
      %v2259 = vrot.slane %v2252, 7
      %vm2260 = vcmp.lt.s32.totalorder %v2221, 1
      %v2261 = vsel %vm2260, %v2258, %v2259
      %v2262 = vsel %vm2260, %v2259, %v2258
      %v2263 = vand.u32 %v2225, 1
      %v2264 = vand.u32 %v2226, 1
      %vm2265 = vcmp.eq.s32.totalorder %v2263, 0
      %vm2266 = vcmp.eq.s32.totalorder %v2264, 0
      %v2267 = vsel %vm2265, %v2256, %v2262
      %v2268 = vsel %vm2266, %v2257, %v2261
      %v2269 = vmax.f32 %v2251, %v2267
      %v2270 = vmax.f32 %v2252, %v2268
      %v2271 = vrot.slane %v2269, 2
      %v2272 = vrot.slane %v2270, 2
      %vm2273 = vcmp.lt.s32.totalorder %v2221, 6
      %v2274 = vsel %vm2273, %v2271, %v2272
      %v2275 = vsel %vm2273, %v2272, %v2271
      %v2276 = vrot.slane %v2269, 6
      %v2277 = vrot.slane %v2270, 6
      %vm2278 = vcmp.lt.s32.totalorder %v2221, 2
      %v2279 = vsel %vm2278, %v2276, %v2277
      %v2280 = vsel %vm2278, %v2277, %v2276
      %v2281 = vand.u32 %v2225, 2
      %v2282 = vand.u32 %v2226, 2
      %vm2283 = vcmp.eq.s32.totalorder %v2281, 0
      %vm2284 = vcmp.eq.s32.totalorder %v2282, 0
      %v2285 = vsel %vm2283, %v2274, %v2280
      %v2286 = vsel %vm2284, %v2275, %v2279
      %v2287 = vmax.f32 %v2269, %v2285
      %v2288 = vmax.f32 %v2270, %v2286
      %v2289 = vsub.f32 %v2251, %v2287
      %v2290 = vsub.f32 %v2252, %v2288
      %v2291 = vmul.f32 %v2289, 1.442695
      %v2292 = vpow.pop %v2291
      %v2293 = vmul.f32 %v2290, 1.442695
      %v2294 = vpow.pop %v2293
      %v2295 = vrot.slane %v2292, 1
      %v2296 = vrot.slane %v2294, 1
      %v2297 = vsel %vm2255, %v2295, %v2296
      %v2298 = vsel %vm2255, %v2296, %v2295
      %v2299 = vrot.slane %v2292, 7
      %v2300 = vrot.slane %v2294, 7
      %v2301 = vsel %vm2260, %v2299, %v2300
      %v2302 = vsel %vm2260, %v2300, %v2299
      %v2303 = vsel %vm2265, %v2297, %v2302
      %v2304 = vsel %vm2266, %v2298, %v2301
      %v2305 = vadd.f32 %v2292, %v2303
      %v2306 = vadd.f32 %v2294, %v2304
      %v2307 = vrot.slane %v2305, 2
      %v2308 = vrot.slane %v2306, 2
      %v2309 = vsel %vm2273, %v2307, %v2308
      %v2310 = vsel %vm2273, %v2308, %v2307
      %v2311 = vrot.slane %v2305, 6
      %v2312 = vrot.slane %v2306, 6
      %v2313 = vsel %vm2278, %v2311, %v2312
      %v2314 = vsel %vm2278, %v2312, %v2311
      %v2315 = vsel %vm2283, %v2309, %v2314
      %v2316 = vsel %vm2284, %v2310, %v2313
      %v2317 = vadd.f32 %v2305, %v2315
      %v2318 = vadd.f32 %v2306, %v2316
      %v2319 = vrcp.pop %v2317
      %v2320 = vrcp.pop %v2318
      %v2321 = vmul.f32 %v2292, %v2319
      %v2322 = vmul.f32 %v2294, %v2320
      %v2323 = vld [vmem:[%s300] sm:$0xff]
      %v2324 = vld [vmem:[%s300 + $0x8] sm:$0xff]
      %2326 = vset.pattern.permute.xlu0 0
      %2327 = vperm.xlu0 %2326, %v2321
      %v2328 = vpop.permute.xlu0 %2327
      %2331 = vset.pattern.permute.xlu0 0
      %2332 = vperm.xlu0 %2331, %v2322
      %v2333 = vpop.permute.xlu0 %2332
      %v2335 = vmul.f32 %v2328, %v2323
      %v2336 = vmul.f32 %v2333, %v2324
      %vm2337 = vcmask 261120
      %2338 = vst.msk [vmem:[%s310] sm:$0xff] %vm2337, %v2335
      %2339 = vst.msk [vmem:[%s310 + $0x8] sm:$0xff] %vm2337, %v2336
      %s2340 = smul.u32 2, %s20
      %p2341 = scmp.lt.s32.totalorder %s19, 1
      %s2342 = scalar_select %p2341, %s19, 1
      %p2343 = scmp.lt.s32.totalorder %s2340, 1
      %s2344 = scalar_select %p2343, %s2340, 1
      %s2345 = smul.addr %s2342, 2
      %s2346 = sadd.s32 %s2344, %s2345
      %s2347 = smul.addr %s2346, 8
      %s2348 = scalar_lea.vmem %s4, %s2347
      // Predicated region
      $region37: #{tpu_custom_call.1} parent=35 // pred_check
        %p2349 = pneg %p152
      $region38: #{tpu_custom_call.1} parent=35 // pred_check_branch
        %2351 = sbr.rel (%p2349) target = $region40
      $region39: #{tpu_custom_call.1} parent=35 // pred_region
        %s2352 = smul.u32 2, %s20
      $region40: #{tpu_custom_call.1} parent=35 // pred_fallthru
        _
    $region36: #{tpu_custom_call.1} parent=5 // pred_fallthru
      _
    %p2353 = scmp.le.s32.totalorder 2, %s10
    // Predicated region
    $region41: #{tpu_custom_call.1} parent=5 // pred_check
      %p2354 = pneg %p2353
    $region42: #{tpu_custom_call.1} parent=5 // pred_check_branch
      %2356 = sbr.rel (%p2354) target = $region44
    $region43: #{tpu_custom_call.1} parent=5 // pred_region
      %s2357 = ssub.s32 %s10, 2
      // Predicated region
      $region45: #{tpu_custom_call.1} parent=43 // pred_check
        %p2358 = pneg %p158
      $region46: #{tpu_custom_call.1} parent=43 // pred_check_branch
        %2360 = sbr.rel (%p2358) target = $region48
      $region47: #{tpu_custom_call.1} parent=43 // pred_region
        %s2361 = smul.u32 2, %s22
        %p2362 = scmp.lt.s32.totalorder %s21, 1
        %s2363 = scalar_select %p2362, %s21, 1
        %p2364 = scmp.lt.s32.totalorder %s2361, 1
        %s2365 = scalar_select %p2364, %s2361, 1
        %s2366 = smul.addr %s2363, 2
        %s2367 = sadd.s32 %s2365, %s2366
        %s2368 = smul.addr %s2367, 8
        %s2369 = scalar_lea.vmem %s4, %s2368
      $region48: #{tpu_custom_call.1} parent=43 // pred_fallthru
        _
    $region44: #{tpu_custom_call.1} parent=5 // pred_fallthru
      _
  $region6: #{tpu_custom_call.1} parent=0 // loop_footer
    %s14 = sadd.s32 1, %s10
  $region7: #{tpu_custom_call.1} parent=0 // loop_footer_branch
    %9 = sbr.rel target = $region3
  $region8: #{tpu_custom_call.1} parent=0 // loop_exit
    _

</llo_original>
